<compile_context>
chip_gen: v5e
topology: v5e:2x2
jax: 0.10.0
libtpu: 0.0.40
codegen_flags: <defaults>
</compile_context>

<pallas_src>
import functools
import math

import jax
import jax.numpy as jnp
from jax.experimental import pallas as pl
from jax.experimental.pallas import tpu as pltpu


_ROW_TILE = 512     # mem-bound row tile (~85% of HBM roofline at >=512 rows)
_QUERY_TILE = 256   # attention query tile; scores bounded to TQ * L f32

# Flip to jnp.bfloat16 on v6e/v7x for 2-4x MXU throughput (and store the weights
# in bf16 to also halve weight DMA).  The f32 1e-3 check below needs float32.
_MATMUL_DTYPE = jnp.float32


def _mm(a, b):
    """MXU matmul with f32 accumulation; operand dtype gated by _MATMUL_DTYPE."""
    return jnp.dot(a.astype(_MATMUL_DTYPE), b.astype(_MATMUL_DTYPE),
                   preferred_element_type=jnp.float32)


def _compiler_params(sems, est_vmem_bytes=0):
    """dimension_semantics + explicit scoped-VMEM limit when the estimate needs it.

    The budget doubles the block footprint (BlockSpec double-buffering) plus a
    2 MiB margin.  Only overrides the default when it exceeds v5e's 16 MiB
    conservative default, and never asks for more than v7x's 64 MiB physical.
    # TODO(synk): at production D/Dff, additionally single-buffer the
    # grid-invariant weight BlockSpecs (pipeline_mode=pl.Buffered(1)).
    """
    kwargs = {"dimension_semantics": sems}
    budget = 2 * int(est_vmem_bytes) + (2 << 20)
    if budget > (16 << 20):
        kwargs["vmem_limit_bytes"] = min(budget, 64 << 20)
    return pltpu.CompilerParams(**kwargs)


# ------------------------- Standalone LayerNorm (fallback) -------------------

def _layernorm_kernel(x_ref, g_ref, b_ref, o_ref, *, eps):
    x = x_ref[...]
    mu = jnp.mean(x, axis=-1, keepdims=True)
    var = jnp.mean(jnp.square(x - mu), axis=-1, keepdims=True)
    o_ref[...] = (x - mu) * jax.lax.rsqrt(var + eps) * g_ref[...] + b_ref[...]


def layernorm(x, gamma, beta, eps=1e-5, tm=_ROW_TILE):
    """Only used when the final norm cannot be fused (last op is a conv layer)."""
    lead = x.shape[:-1]
    D = x.shape[-1]
    n = int(math.prod(lead))
    TM = min(n, tm)
    est = 4 * (2 * TM * D + 2 * D)
    out = pl.pallas_call(
        functools.partial(_layernorm_kernel, eps=eps),
        grid=(pl.cdiv(n, TM),),
        in_specs=[pl.BlockSpec((TM, D), lambda i: (i, 0)),
                  pl.BlockSpec((1, D), lambda i: (0, 0)),
                  pl.BlockSpec((1, D), lambda i: (0, 0))],
        out_specs=pl.BlockSpec((TM, D), lambda i: (i, 0)),
        out_shape=jax.ShapeDtypeStruct((n, D), jnp.float32),
        compiler_params=_compiler_params(("parallel",), est),
    )(x.reshape(n, D), gamma.reshape(1, D), beta.reshape(1, D))
    return out.reshape(*lead, D)


# -------- Fused (embed-add) + MHA + out-proj + residual + LayerNorm ----------

def _attn_addnorm_kernel(*refs, n_heads, scale, eps, fuse_embed):
    """LN1( x + MHA(x) ) for one (batch, query-tile) grid point.

    With fuse_embed=True, x = val_time_emb + space_emb is formed in the
    prologue (first encoder layer), removing the standalone embedding-add pass.
    """
    if fuse_embed:
        (vtq_ref, spq_ref, vtf_ref, spf_ref,
         wq_ref, bq_ref, wkv_ref, bkv_ref, wo_ref, bo_ref,
         g_ref, beta_ref, o_ref) = refs
        xq = vtq_ref[0] + spq_ref[0]            # (TQ, D) query rows
        xf = vtf_ref[0] + spf_ref[0]            # (L, D)  full K/V source
    else:
        (xq_ref, xf_ref,
         wq_ref, bq_ref, wkv_ref, bkv_ref, wo_ref, bo_ref,
         g_ref, beta_ref, o_ref) = refs
        xq = xq_ref[0]
        xf = xf_ref[0]

    TQ, D = xq.shape
    dh = D // n_heads

    # Lane-dense projections: Q from the query tile, fused K|V from full x.
    q = _mm(xq, wq_ref[...]) + bq_ref[...]      # (TQ, D)
    kv = _mm(xf, wkv_ref[...]) + bkv_ref[...]   # (L, 2D)

    # Per-head attention; output projection accumulated per head (no concat).
    # TODO(synk): pack heads so the MXU sees K/N >= 256 when dh < 128, and
    # switch to a KV-blocked flash-style online softmax for very long L.
    y = xq + bo_ref[...]
    for h in range(n_heads):                    # static unroll
        qh = q[:, h * dh:(h + 1) * dh]
        kh = kv[:, h * dh:(h + 1) * dh]
        vh = kv[:, D + h * dh:D + (h + 1) * dh]
        s = jax.lax.dot_general(qh.astype(_MATMUL_DTYPE), kh.astype(_MATMUL_DTYPE),
                                (((1,), (1,)), ((), ())),
                                preferred_element_type=jnp.float32) * scale
        s = s - jnp.max(s, axis=-1, keepdims=True)
        p = jnp.exp(s)
        p = p / jnp.sum(p, axis=-1, keepdims=True)   # exact softmax normalization
        attn_h = _mm(p, vh)                          # (TQ, dh)
        y = y + _mm(attn_h, wo_ref[h * dh:(h + 1) * dh, :])

    # Residual already in y (y = xq + bo + sum_h ...); LayerNorm1.
    mu = jnp.mean(y, axis=-1, keepdims=True)
    var = jnp.mean(jnp.square(y - mu), axis=-1, keepdims=True)
    o_ref[0] = (y - mu) * jax.lax.rsqrt(var + eps) * g_ref[...] + beta_ref[...]


def attn_addnorm(x_or_embs, p, gamma, beta, n_heads, eps=1e-5, fuse_embed=False):
    if fuse_embed:
        vt, sp = x_or_embs
        B, L, D = vt.shape
    else:
        x = x_or_embs
        B, L, D = x.shape
    dh = D // n_heads
    TQ = L if L <= _QUERY_TILE else _QUERY_TILE
    nq = pl.cdiv(L, TQ)

    q_spec = pl.BlockSpec((1, TQ, D), lambda b, qi: (b, qi, 0))
    f_spec = pl.BlockSpec((1, L, D), lambda b, qi: (b, 0, 0))
    vec = pl.BlockSpec((1, D), lambda b, qi: (0, 0))

    if fuse_embed:
        x_specs = [q_spec, q_spec, f_spec, f_spec]
        x_args = [vt, sp, vt, sp]
    else:
        x_specs = [q_spec, f_spec]
        x_args = [x, x]

    in_specs = x_specs + [
        pl.BlockSpec((D, D), lambda b, qi: (0, 0)),        # wq
        vec,                                               # bq
        pl.BlockSpec((D, 2 * D), lambda b, qi: (0, 0)),    # wkv (fused at init)
        pl.BlockSpec((1, 2 * D), lambda b, qi: (0, 0)),    # bkv
        pl.BlockSpec((D, D), lambda b, qi: (0, 0)),        # wo
        vec, vec, vec,                                     # bo, gamma, beta
    ]
    args = x_args + [p["wq"], p["bq"].reshape(1, D),
                     p["wkv"], p["bkv"].reshape(1, 2 * D),
                     p["wo"], p["bo"].reshape(1, D),
                     gamma.reshape(1, D), beta.reshape(1, D)]

    nx = 2 if fuse_embed else 1
    est = 4 * (nx * (TQ * D + L * D)        # x blocks
               + 4 * D * D + 6 * D          # weights / biases
               + TQ * L + 2 * L * D         # scores + kv intermediate
               + 4 * TQ * D)                # q, y, out block

    return pl.pallas_call(
        functools.partial(_attn_addnorm_kernel, n_heads=n_heads,
                          scale=1.0 / math.sqrt(dh), eps=eps,
                          fuse_embed=fuse_embed),
        grid=(B, nq),
        in_specs=in_specs,
        out_specs=pl.BlockSpec((1, TQ, D), lambda b, qi: (b, qi, 0)),
        out_shape=jax.ShapeDtypeStruct((B, L, D), jnp.float32),
        compiler_params=_compiler_params(("parallel", "parallel"), est),
    )(*args)


# ---------------- Fused FFN + residual + LN2 (+ optional final LN) -----------

def _ffn_addnorm_kernel(*refs, eps, final_norm):
    """LN2( x + W2(relu(W1 x)) ), optionally followed by the encoder's final
    LayerNorm in the same epilogue.  The (TM, Dff) intermediate stays in VMEM."""
    if final_norm:
        (x_ref, w1_ref, b1_ref, w2_ref, b2_ref, g_ref, beta_ref,
         fg_ref, fb_ref, o_ref) = refs
    else:
        (x_ref, w1_ref, b1_ref, w2_ref, b2_ref, g_ref, beta_ref, o_ref) = refs

    x = x_ref[...]                                           # (TM, D)
    h = jnp.maximum(_mm(x, w1_ref[...]) + b1_ref[...], 0.0)  # (TM, Dff)
    y = x + _mm(h, w2_ref[...]) + b2_ref[...]
    mu = jnp.mean(y, axis=-1, keepdims=True)
    var = jnp.mean(jnp.square(y - mu), axis=-1, keepdims=True)
    y = (y - mu) * jax.lax.rsqrt(var + eps) * g_ref[...] + beta_ref[...]
    if final_norm:
        mu = jnp.mean(y, axis=-1, keepdims=True)
        var = jnp.mean(jnp.square(y - mu), axis=-1, keepdims=True)
        y = (y - mu) * jax.lax.rsqrt(var + eps) * fg_ref[...] + fb_ref[...]
    o_ref[...] = y


def ffn_addnorm(x, w1, b1, w2, b2, gamma, beta, eps=1e-5, tm=_ROW_TILE,
                final_g=None, final_b=None):
    lead = x.shape[:-1]
    D = x.shape[-1]
    Dff = w1.shape[1]
    n = int(math.prod(lead))
    TM = min(n, tm)
    final_norm = final_g is not None

    vec_d = pl.BlockSpec((1, D), lambda i: (0, 0))
    in_specs = [pl.BlockSpec((TM, D), lambda i: (i, 0)),
                pl.BlockSpec((D, Dff), lambda i: (0, 0)),
                pl.BlockSpec((1, Dff), lambda i: (0, 0)),
                pl.BlockSpec((Dff, D), lambda i: (0, 0)),
                vec_d, vec_d, vec_d]
    args = [x.reshape(n, D), w1, b1.reshape(1, Dff), w2, b2.reshape(1, D),
            gamma.reshape(1, D), beta.reshape(1, D)]
    if final_norm:
        in_specs += [vec_d, vec_d]
        args += [final_g.reshape(1, D), final_b.reshape(1, D)]

    est = 4 * (2 * TM * D + 2 * D * Dff + Dff + 6 * D + TM * Dff + TM * D)
    out = pl.pallas_call(
        functools.partial(_ffn_addnorm_kernel, eps=eps, final_norm=final_norm),
        grid=(pl.cdiv(n, TM),),
        in_specs=in_specs,
        out_specs=pl.BlockSpec((TM, D), lambda i: (i, 0)),
        out_shape=jax.ShapeDtypeStruct((n, D), jnp.float32),
        compiler_params=_compiler_params(("parallel",), est),
    )(*args)
    return out.reshape(*lead, D)


# -------------------- Conv1d + BN(eval) + ELU + MaxPool ----------------------

def _conv_distill_kernel(x_ref, w_ref, b_ref, g_ref, beta_ref, mean_ref, var_ref,
                         o_ref, *, eps):
    # Conv1d(D, D, kernel=3, pad=1) + BatchNorm1d(eval) + ELU
    # + MaxPool1d(kernel=3, stride=2, padding=1), all along the L axis.
    x = x_ref[0]                                            # (L, D)
    L, D = x.shape

    # Shifted taps via XLU rolls + iota masks (no concatenate-induced copies).
    row = jax.lax.broadcasted_iota(jnp.int32, (L, D), 0)
    xm1 = jnp.where(row == 0, 0.0, pltpu.roll(x, 1, axis=0))          # x[t-1]
    xp1 = jnp.where(row == L - 1, 0.0, pltpu.roll(x, L - 1, axis=0))  # x[t+1]

    # Three accumulated K=D matmuls (no (L, 3D) concat copy; MRB accumulates
    # in place on v7x).
    y = (_mm(xm1, w_ref[0]) + _mm(x, w_ref[1]) + _mm(xp1, w_ref[2])
         + b_ref[...])

    # BatchNorm1d (eval mode) over the channel axis D.
    y = (y - mean_ref[...]) * jax.lax.rsqrt(var_ref[...] + eps) * g_ref[...] \
        + beta_ref[...]
    # ELU(alpha=1).
    y = jnp.where(y > 0, y, jnp.exp(jnp.minimum(y, 0.0)) - 1.0)

    # MaxPool1d(kernel=3, stride=2, padding=1): out[t] = max(y[2t-1:2t+2]).
    # 3-way max first (two XLU rolls), then a single stride-2 row selection.
    ym1 = jnp.where(row == 0, -jnp.inf, pltpu.roll(y, 1, axis=0))          # y[t-1]
    yp1 = jnp.where(row == L - 1, -jnp.inf, pltpu.roll(y, L - 1, axis=0))  # y[t+1]
    m = jnp.maximum(jnp.maximum(ym1, y), yp1)               # (L, D)
    if L % 2 == 1:                                          # pad to even rows;
        m = jnp.concatenate([m, jnp.zeros((1, D), m.dtype)], axis=0)  # never selected
    half = m.shape[0] // 2                                  # == (L-1)//2 + 1
    o_ref[0] = m.reshape(half, 2, D)[:, 0, :]               # even rows: m[2t]


def conv_distill(x, p, eps=1e-5):
    B, L, D = x.shape
    l_out = (L - 1) // 2 + 1          # exact PyTorch MaxPool1d(k=3,s=2,p=1) length
    vec = pl.BlockSpec((1, D), lambda b: (0, 0))
    est = 4 * (L * D + 3 * D * D + 6 * D + 4 * L * D + l_out * D)
    return pl.pallas_call(
        functools.partial(_conv_distill_kernel, eps=eps),
        grid=(B,),
        in_specs=[pl.BlockSpec((1, L, D), lambda b: (b, 0, 0)),
                  pl.BlockSpec((3, D, D), lambda b: (0, 0, 0)),
                  vec, vec, vec, vec, vec],
        out_specs=pl.BlockSpec((1, l_out, D), lambda b: (b, 0, 0)),
        out_shape=jax.ShapeDtypeStruct((B, l_out, D), jnp.float32),
        compiler_params=_compiler_params(("parallel",), est),
    )(x, p["w"], p["b"].reshape(1, D), p["bn_g"].reshape(1, D),
      p["bn_b"].reshape(1, D), p["bn_mean"].reshape(1, D),
      p["bn_var"].reshape(1, D))


# ----------------------------- Encoder forward -------------------------------

def encoder_forward(val_time_emb, space_emb, params, n_heads):
    # emb_dropout(p=0.0) is the identity; the embedding sum is fused into the
    # first attention kernel, the final LayerNorm into the last FFN kernel.
    n_attn = len(params["attn_layers"])
    n_conv = len(params["conv_layers"])
    x = None
    attns = []
    for i, lp in enumerate(params["attn_layers"]):
        if i == 0:
            x = attn_addnorm((val_time_emb, space_emb), lp["attn"],
                             lp["n1_g"], lp["n1_b"], n_heads, fuse_embed=True)
        else:
            x = attn_addnorm(x, lp["attn"], lp["n1_g"], lp["n1_b"], n_heads)

        is_last_attn = (i == n_attn - 1)
        has_conv = i < n_conv
        fuse_final = is_last_attn and not has_conv
        x = ffn_addnorm(x, lp["w1"], lp["b1"], lp["w2"], lp["b2"],
                        lp["n2_g"], lp["n2_b"],
                        final_g=params["norm_g"] if fuse_final else None,
                        final_b=params["norm_b"] if fuse_final else None)
        if has_conv:
            x = conv_distill(x, params["conv_layers"][i])
            if is_last_attn:
                # TODO(synk): fuse the final LayerNorm into conv_distill's
                # epilogue when a conv layer is the last op of the stack.
                x = layernorm(x, params["norm_g"], params["norm_b"])
        attns.append(None)   # output_attn=False -> attn is None
    return x, attns


# ----------------------------- Parameters ------------------------------------

def init_params(key, D, Dff, n_attn_layers, n_conv_layers):
    def w(k, shape, scale=0.02):
        return (scale * jax.random.normal(k, shape)).astype(jnp.float32)

    keys = iter(jax.random.split(key, 128))
    attn_layers = []
    for _ in range(n_attn_layers):
        a = {
            "wq": w(next(keys), (D, D)), "bq": jnp.zeros((D,), jnp.float32),
            "wk": w(next(keys), (D, D)), "bk": jnp.zeros((D,), jnp.float32),
            "wv": w(next(keys), (D, D)), "bv": jnp.zeros((D,), jnp.float32),
            "wo": w(next(keys), (D, D)), "bo": jnp.zeros((D,), jnp.float32),
        }
        # Fused K|V weight/bias built ONCE at init time (not per forward).
        a["wkv"] = jnp.concatenate([a["wk"], a["wv"]], axis=1)
        a["bkv"] = jnp.concatenate([a["bk"], a["bv"]])
        attn_layers.append({
            "attn": a,
            "w1": w(next(keys), (D, Dff)), "b1": jnp.zeros((Dff,), jnp.float32),
            "w2": w(next(keys), (Dff, D)), "b2": jnp.zeros((D,), jnp.float32),
            "n1_g": jnp.ones((D,), jnp.float32), "n1_b": jnp.zeros((D,), jnp.float32),
            "n2_g": jnp.ones((D,), jnp.float32), "n2_b": jnp.zeros((D,), jnp.float32),
        })
    conv_layers = []
    for _ in range(n_conv_layers):
        conv_layers.append({
            "w": w(next(keys), (3, D, D)),               # taps for x[t-1], x[t], x[t+1]
            "b": jnp.zeros((D,), jnp.float32),
            "bn_g": jnp.ones((D,), jnp.float32),
            "bn_b": jnp.zeros((D,), jnp.float32),
            "bn_mean": 0.1 * jnp.ones((D,), jnp.float32),
            "bn_var": jnp.ones((D,), jnp.float32),
        })
    return {"attn_layers": attn_layers, "conv_layers": conv_layers,
            "norm_g": jnp.ones((D,), jnp.float32),
            "norm_b": jnp.zeros((D,), jnp.float32)}


# ----------------------------- Pure-JAX reference ----------------------------

def _ref_layernorm(x, g, b, eps=1e-5):
    mu = x.mean(-1, keepdims=True)
    var = ((x - mu) ** 2).mean(-1, keepdims=True)
    return (x - mu) / jnp.sqrt(var + eps) * g + b


def _ref_forward(vt, sp, params, H):
    x = vt + sp
    for i, p in enumerate(params["attn_layers"]):
        B, L, D = x.shape
        dh = D // H
        a = p["attn"]
        q = (x @ a["wq"] + a["bq"]).reshape(B, L, H, dh)
        k = (x @ a["wk"] + a["bk"]).reshape(B, L, H, dh)
        v = (x @ a["wv"] + a["bv"]).reshape(B, L, H, dh)
        s = jnp.einsum("blhd,bshd->bhls", q, k) / math.sqrt(dh)
        attn = jax.nn.softmax(s, axis=-1)
        o = jnp.einsum("bhls,bshd->blhd", attn, v).reshape(B, L, D)
        o = o @ a["wo"] + a["bo"]
        x = _ref_layernorm(x + o, p["n1_g"], p["n1_b"])
        y = jax.nn.relu(x @ p["w1"] + p["b1"]) @ p["w2"] + p["b2"]
        x = _ref_layernorm(x + y, p["n2_g"], p["n2_b"])
        if i < len(params["conv_layers"]):
            cp = params["conv_layers"][i]
            xp = jnp.pad(x, ((0, 0), (1, 1), (0, 0)))
            y = (xp[:, :-2] @ cp["w"][0] + xp[:, 1:-1] @ cp["w"][1]
                 + xp[:, 2:] @ cp["w"][2] + cp["b"])
            y = (y - cp["bn_mean"]) / jnp.sqrt(cp["bn_var"] + 1e-5) * cp["bn_g"] \
                + cp["bn_b"]
            y = jnp.where(y > 0, y, jnp.exp(jnp.minimum(y, 0.0)) - 1.0)
            _, L2, _ = y.shape
            ypad = jnp.pad(y, ((0, 0), (1, 1), (0, 0)), constant_values=-jnp.inf)
            x = jnp.stack([jnp.max(ypad[:, 2 * t:2 * t + 3], axis=1)
                           for t in range((L2 - 1) // 2 + 1)], axis=1)
    return _ref_layernorm(x, params["norm_g"], params["norm_b"])


# ----------------------------- Main -------------------------------------------

if __name__ == "__main__":
    B, L, D, H, Dff = 2, 8, 32, 4, 64
    key = jax.random.PRNGKey(0)
    k1, k2, k3 = jax.random.split(key, 3)
    val_time_emb = jax.random.normal(k1, (B, L, D), jnp.float32)
    space_emb = jax.random.normal(k2, (B, L, D), jnp.float32)
    params = init_params(k3, D, Dff, n_attn_layers=2, n_conv_layers=1)

    out, attns = encoder_forward(val_time_emb, space_emb, params, H)
    out = jax.block_until_ready(out)

    ref = _ref_forward(val_time_emb, space_emb, params, H)
    assert out.shape == (B, L // 2, D), out.shape     # one distilling conv: L -> L//2
    assert attns == [None, None]
    assert jnp.allclose(out, ref, rtol=1e-3, atol=1e-3), \
        float(jnp.abs(out - ref).max())

    print("KERNEL_OK")
</pallas_src>

<mosaic_0001>
module attributes {stable_mosaic.version = 11 : i64} {
  func.func @_attn_addnorm_kernel(%arg0: i32, %arg1: i32, %arg2: memref<1x8x32xf32, #tpu.memory_space<vmem>>, %arg3: memref<1x8x32xf32, #tpu.memory_space<vmem>>, %arg4: memref<1x8x32xf32, #tpu.memory_space<vmem>>, %arg5: memref<1x8x32xf32, #tpu.memory_space<vmem>>, %arg6: memref<32x32xf32, #tpu.memory_space<vmem>>, %arg7: memref<1x32xf32, #tpu.memory_space<vmem>>, %arg8: memref<32x64xf32, #tpu.memory_space<vmem>>, %arg9: memref<1x64xf32, #tpu.memory_space<vmem>>, %arg10: memref<32x32xf32, #tpu.memory_space<vmem>>, %arg11: memref<1x32xf32, #tpu.memory_space<vmem>>, %arg12: memref<1x32xf32, #tpu.memory_space<vmem>>, %arg13: memref<1x32xf32, #tpu.memory_space<vmem>>, %arg14: memref<1x8x32xf32, #tpu.memory_space<vmem>>) attributes {dimension_semantics = [#tpu.dimension_semantics<parallel>, #tpu.dimension_semantics<parallel>], iteration_bounds = array<i64: 2, 1>, scalar_prefetch = 0 : i64, scratch_operands = 0 : i64, tpu.core_type = #tpu.core_type<tc>, window_params = [{transform_indices = @transform_0, window_bounds = array<i64: 1, 8, 32>}, {transform_indices = @transform_1, window_bounds = array<i64: 1, 8, 32>}, {transform_indices = @transform_2, window_bounds = array<i64: 1, 8, 32>}, {transform_indices = @transform_3, window_bounds = array<i64: 1, 8, 32>}, {pipeline_mode = #tpu.pipeline_mode<synchronous>, transform_indices = @transform_4, window_bounds = array<i64: 32, 32>}, {pipeline_mode = #tpu.pipeline_mode<synchronous>, transform_indices = @transform_5, window_bounds = array<i64: 1, 32>}, {pipeline_mode = #tpu.pipeline_mode<synchronous>, transform_indices = @transform_6, window_bounds = array<i64: 32, 64>}, {pipeline_mode = #tpu.pipeline_mode<synchronous>, transform_indices = @transform_7, window_bounds = array<i64: 1, 64>}, {pipeline_mode = #tpu.pipeline_mode<synchronous>, transform_indices = @transform_8, window_bounds = array<i64: 32, 32>}, {pipeline_mode = #tpu.pipeline_mode<synchronous>, transform_indices = @transform_9, window_bounds = array<i64: 1, 32>}, {pipeline_mode = #tpu.pipeline_mode<synchronous>, transform_indices = @transform_10, window_bounds = array<i64: 1, 32>}, {pipeline_mode = #tpu.pipeline_mode<synchronous>, transform_indices = @transform_11, window_bounds = array<i64: 1, 32>}, {transform_indices = @transform_12, window_bounds = array<i64: 1, 8, 32>}]} {
    %c0 = arith.constant 0 : index
    %c0_0 = arith.constant 0 : index
    %c0_1 = arith.constant 0 : index
    %0 = vector.load %arg2[%c0, %c0_0, %c0_1] : memref<1x8x32xf32, #tpu.memory_space<vmem>>, vector<1x8x32xf32>
    %1 = vector.shape_cast %0 : vector<1x8x32xf32> to vector<8x32xf32>
    %c0_2 = arith.constant 0 : index
    %c0_3 = arith.constant 0 : index
    %c0_4 = arith.constant 0 : index
    %2 = vector.load %arg3[%c0_2, %c0_3, %c0_4] : memref<1x8x32xf32, #tpu.memory_space<vmem>>, vector<1x8x32xf32>
    %3 = vector.shape_cast %2 : vector<1x8x32xf32> to vector<8x32xf32>
    %4 = arith.addf %1, %3 : vector<8x32xf32>
    %c0_5 = arith.constant 0 : index
    %c0_6 = arith.constant 0 : index
    %c0_7 = arith.constant 0 : index
    %5 = vector.load %arg4[%c0_5, %c0_6, %c0_7] : memref<1x8x32xf32, #tpu.memory_space<vmem>>, vector<1x8x32xf32>
    %6 = vector.shape_cast %5 : vector<1x8x32xf32> to vector<8x32xf32>
    %c0_8 = arith.constant 0 : index
    %c0_9 = arith.constant 0 : index
    %c0_10 = arith.constant 0 : index
    %7 = vector.load %arg5[%c0_8, %c0_9, %c0_10] : memref<1x8x32xf32, #tpu.memory_space<vmem>>, vector<1x8x32xf32>
    %8 = vector.shape_cast %7 : vector<1x8x32xf32> to vector<8x32xf32>
    %9 = arith.addf %6, %8 : vector<8x32xf32>
    %c0_11 = arith.constant 0 : index
    %c0_12 = arith.constant 0 : index
    %10 = vector.load %arg6[%c0_11, %c0_12] : memref<32x32xf32, #tpu.memory_space<vmem>>, vector<32x32xf32>
    %cst = arith.constant dense<0.000000e+00> : vector<8x32xf32>
    %11 = tpu.matmul %4, %10, %cst {dimension_numbers = #tpu.dot_dimension_numbers<[1], [0], [0], [1], [0, 0, 1, 1], [], []>} : vector<8x32xf32>, vector<32x32xf32>, vector<8x32xf32> -> vector<8x32xf32>
    %c0_13 = arith.constant 0 : index
    %c0_14 = arith.constant 0 : index
    %12 = vector.load %arg7[%c0_13, %c0_14] : memref<1x32xf32, #tpu.memory_space<vmem>>, vector<1x32xf32>
    %13 = vector.broadcast %12 : vector<1x32xf32> to vector<8x32xf32>
    %14 = arith.addf %11, %13 : vector<8x32xf32>
    %c0_15 = arith.constant 0 : index
    %c0_16 = arith.constant 0 : index
    %15 = vector.load %arg8[%c0_15, %c0_16] : memref<32x64xf32, #tpu.memory_space<vmem>>, vector<32x64xf32>
    %cst_17 = arith.constant dense<0.000000e+00> : vector<8x64xf32>
    %16 = tpu.matmul %9, %15, %cst_17 {dimension_numbers = #tpu.dot_dimension_numbers<[1], [0], [0], [1], [0, 0, 1, 1], [], []>} : vector<8x32xf32>, vector<32x64xf32>, vector<8x64xf32> -> vector<8x64xf32>
    %c0_18 = arith.constant 0 : index
    %c0_19 = arith.constant 0 : index
    %17 = vector.load %arg9[%c0_18, %c0_19] : memref<1x64xf32, #tpu.memory_space<vmem>>, vector<1x64xf32>
    %18 = vector.broadcast %17 : vector<1x64xf32> to vector<8x64xf32>
    %19 = arith.addf %16, %18 : vector<8x64xf32>
    %c0_20 = arith.constant 0 : index
    %c0_21 = arith.constant 0 : index
    %20 = vector.load %arg11[%c0_20, %c0_21] : memref<1x32xf32, #tpu.memory_space<vmem>>, vector<1x32xf32>
    %21 = vector.broadcast %20 : vector<1x32xf32> to vector<8x32xf32>
    %22 = arith.addf %4, %21 : vector<8x32xf32>
    %23 = vector.extract_strided_slice %14 {offsets = [0, 0], sizes = [8, 8], strides = [1, 1]} : vector<8x32xf32> to vector<8x8xf32>
    %24 = vector.extract_strided_slice %19 {offsets = [0, 0], sizes = [8, 8], strides = [1, 1]} : vector<8x64xf32> to vector<8x8xf32>
    %25 = vector.extract_strided_slice %19 {offsets = [0, 32], sizes = [8, 8], strides = [1, 1]} : vector<8x64xf32> to vector<8x8xf32>
    %cst_22 = arith.constant dense<0.000000e+00> : vector<8x8xf32>
    %26 = tpu.matmul %23, %24, %cst_22 {dimension_numbers = #tpu.dot_dimension_numbers<[1], [1], [0], [0], [0, 0, 1, 0], [], []>} : vector<8x8xf32>, vector<8x8xf32>, vector<8x8xf32> -> vector<8x8xf32>
    %cst_23 = arith.constant 0.353553385 : f32
    %27 = vector.broadcast %cst_23 : f32 to vector<8x8xf32>
    %28 = arith.mulf %26, %27 : vector<8x8xf32>
    %cst_24 = arith.constant dense<0xFF800000> : vector<8xf32>
    %29 = vector.multi_reduction <maximumf>, %28, %cst_24 [1] : vector<8x8xf32> to vector<8xf32>
    %30 = vector.shape_cast %29 : vector<8xf32> to vector<8x1xf32>
    %31 = vector.broadcast %30 : vector<8x1xf32> to vector<8x8xf32>
    %32 = arith.subf %28, %31 : vector<8x8xf32>
    %33 = math.exp %32 : vector<8x8xf32>
    %cst_25 = arith.constant dense<0.000000e+00> : vector<8xf32>
    %34 = vector.multi_reduction <add>, %33, %cst_25 [1] : vector<8x8xf32> to vector<8xf32>
    %35 = vector.shape_cast %34 : vector<8xf32> to vector<8x1xf32>
    %36 = vector.broadcast %35 : vector<8x1xf32> to vector<8x8xf32>
    %37 = arith.divf %33, %36 : vector<8x8xf32>
    %cst_26 = arith.constant dense<0.000000e+00> : vector<8x8xf32>
    %38 = tpu.matmul %37, %25, %cst_26 {dimension_numbers = #tpu.dot_dimension_numbers<[1], [0], [0], [1], [0, 0, 1, 1], [], []>} : vector<8x8xf32>, vector<8x8xf32>, vector<8x8xf32> -> vector<8x8xf32>
    %c0_27 = arith.constant 0 : index
    %c0_28 = arith.constant 0 : index
    %39 = vector.load %arg10[%c0_27, %c0_28] : memref<32x32xf32, #tpu.memory_space<vmem>>, vector<8x32xf32>
    %cst_29 = arith.constant dense<0.000000e+00> : vector<8x32xf32>
    %40 = tpu.matmul %38, %39, %cst_29 {dimension_numbers = #tpu.dot_dimension_numbers<[1], [0], [0], [1], [0, 0, 1, 1], [], []>} : vector<8x8xf32>, vector<8x32xf32>, vector<8x32xf32> -> vector<8x32xf32>
    %41 = arith.addf %22, %40 : vector<8x32xf32>
    %42 = vector.extract_strided_slice %14 {offsets = [0, 8], sizes = [8, 8], strides = [1, 1]} : vector<8x32xf32> to vector<8x8xf32>
    %43 = vector.extract_strided_slice %19 {offsets = [0, 8], sizes = [8, 8], strides = [1, 1]} : vector<8x64xf32> to vector<8x8xf32>
    %44 = vector.extract_strided_slice %19 {offsets = [0, 40], sizes = [8, 8], strides = [1, 1]} : vector<8x64xf32> to vector<8x8xf32>
    %cst_30 = arith.constant dense<0.000000e+00> : vector<8x8xf32>
    %45 = tpu.matmul %42, %43, %cst_30 {dimension_numbers = #tpu.dot_dimension_numbers<[1], [1], [0], [0], [0, 0, 1, 0], [], []>} : vector<8x8xf32>, vector<8x8xf32>, vector<8x8xf32> -> vector<8x8xf32>
    %cst_31 = arith.constant 0.353553385 : f32
    %46 = vector.broadcast %cst_31 : f32 to vector<8x8xf32>
    %47 = arith.mulf %45, %46 : vector<8x8xf32>
    %cst_32 = arith.constant dense<0xFF800000> : vector<8xf32>
    %48 = vector.multi_reduction <maximumf>, %47, %cst_32 [1] : vector<8x8xf32> to vector<8xf32>
    %49 = vector.shape_cast %48 : vector<8xf32> to vector<8x1xf32>
    %50 = vector.broadcast %49 : vector<8x1xf32> to vector<8x8xf32>
    %51 = arith.subf %47, %50 : vector<8x8xf32>
    %52 = math.exp %51 : vector<8x8xf32>
    %cst_33 = arith.constant dense<0.000000e+00> : vector<8xf32>
    %53 = vector.multi_reduction <add>, %52, %cst_33 [1] : vector<8x8xf32> to vector<8xf32>
    %54 = vector.shape_cast %53 : vector<8xf32> to vector<8x1xf32>
    %55 = vector.broadcast %54 : vector<8x1xf32> to vector<8x8xf32>
    %56 = arith.divf %52, %55 : vector<8x8xf32>
    %cst_34 = arith.constant dense<0.000000e+00> : vector<8x8xf32>
    %57 = tpu.matmul %56, %44, %cst_34 {dimension_numbers = #tpu.dot_dimension_numbers<[1], [0], [0], [1], [0, 0, 1, 1], [], []>} : vector<8x8xf32>, vector<8x8xf32>, vector<8x8xf32> -> vector<8x8xf32>
    %c8 = arith.constant 8 : index
    %c0_35 = arith.constant 0 : index
    %58 = vector.load %arg10[%c8, %c0_35] : memref<32x32xf32, #tpu.memory_space<vmem>>, vector<8x32xf32>
    %cst_36 = arith.constant dense<0.000000e+00> : vector<8x32xf32>
    %59 = tpu.matmul %57, %58, %cst_36 {dimension_numbers = #tpu.dot_dimension_numbers<[1], [0], [0], [1], [0, 0, 1, 1], [], []>} : vector<8x8xf32>, vector<8x32xf32>, vector<8x32xf32> -> vector<8x32xf32>
    %60 = arith.addf %41, %59 : vector<8x32xf32>
    %61 = vector.extract_strided_slice %14 {offsets = [0, 16], sizes = [8, 8], strides = [1, 1]} : vector<8x32xf32> to vector<8x8xf32>
    %62 = vector.extract_strided_slice %19 {offsets = [0, 16], sizes = [8, 8], strides = [1, 1]} : vector<8x64xf32> to vector<8x8xf32>
    %63 = vector.extract_strided_slice %19 {offsets = [0, 48], sizes = [8, 8], strides = [1, 1]} : vector<8x64xf32> to vector<8x8xf32>
    %cst_37 = arith.constant dense<0.000000e+00> : vector<8x8xf32>
    %64 = tpu.matmul %61, %62, %cst_37 {dimension_numbers = #tpu.dot_dimension_numbers<[1], [1], [0], [0], [0, 0, 1, 0], [], []>} : vector<8x8xf32>, vector<8x8xf32>, vector<8x8xf32> -> vector<8x8xf32>
    %cst_38 = arith.constant 0.353553385 : f32
    %65 = vector.broadcast %cst_38 : f32 to vector<8x8xf32>
    %66 = arith.mulf %64, %65 : vector<8x8xf32>
    %cst_39 = arith.constant dense<0xFF800000> : vector<8xf32>
    %67 = vector.multi_reduction <maximumf>, %66, %cst_39 [1] : vector<8x8xf32> to vector<8xf32>
    %68 = vector.shape_cast %67 : vector<8xf32> to vector<8x1xf32>
    %69 = vector.broadcast %68 : vector<8x1xf32> to vector<8x8xf32>
    %70 = arith.subf %66, %69 : vector<8x8xf32>
    %71 = math.exp %70 : vector<8x8xf32>
    %cst_40 = arith.constant dense<0.000000e+00> : vector<8xf32>
    %72 = vector.multi_reduction <add>, %71, %cst_40 [1] : vector<8x8xf32> to vector<8xf32>
    %73 = vector.shape_cast %72 : vector<8xf32> to vector<8x1xf32>
    %74 = vector.broadcast %73 : vector<8x1xf32> to vector<8x8xf32>
    %75 = arith.divf %71, %74 : vector<8x8xf32>
    %cst_41 = arith.constant dense<0.000000e+00> : vector<8x8xf32>
    %76 = tpu.matmul %75, %63, %cst_41 {dimension_numbers = #tpu.dot_dimension_numbers<[1], [0], [0], [1], [0, 0, 1, 1], [], []>} : vector<8x8xf32>, vector<8x8xf32>, vector<8x8xf32> -> vector<8x8xf32>
    %c16 = arith.constant 16 : index
    %c0_42 = arith.constant 0 : index
    %77 = vector.load %arg10[%c16, %c0_42] : memref<32x32xf32, #tpu.memory_space<vmem>>, vector<8x32xf32>
    %cst_43 = arith.constant dense<0.000000e+00> : vector<8x32xf32>
    %78 = tpu.matmul %76, %77, %cst_43 {dimension_numbers = #tpu.dot_dimension_numbers<[1], [0], [0], [1], [0, 0, 1, 1], [], []>} : vector<8x8xf32>, vector<8x32xf32>, vector<8x32xf32> -> vector<8x32xf32>
    %79 = arith.addf %60, %78 : vector<8x32xf32>
    %80 = vector.extract_strided_slice %14 {offsets = [0, 24], sizes = [8, 8], strides = [1, 1]} : vector<8x32xf32> to vector<8x8xf32>
    %81 = vector.extract_strided_slice %19 {offsets = [0, 24], sizes = [8, 8], strides = [1, 1]} : vector<8x64xf32> to vector<8x8xf32>
    %82 = vector.extract_strided_slice %19 {offsets = [0, 56], sizes = [8, 8], strides = [1, 1]} : vector<8x64xf32> to vector<8x8xf32>
    %cst_44 = arith.constant dense<0.000000e+00> : vector<8x8xf32>
    %83 = tpu.matmul %80, %81, %cst_44 {dimension_numbers = #tpu.dot_dimension_numbers<[1], [1], [0], [0], [0, 0, 1, 0], [], []>} : vector<8x8xf32>, vector<8x8xf32>, vector<8x8xf32> -> vector<8x8xf32>
    %cst_45 = arith.constant 0.353553385 : f32
    %84 = vector.broadcast %cst_45 : f32 to vector<8x8xf32>
    %85 = arith.mulf %83, %84 : vector<8x8xf32>
    %cst_46 = arith.constant dense<0xFF800000> : vector<8xf32>
    %86 = vector.multi_reduction <maximumf>, %85, %cst_46 [1] : vector<8x8xf32> to vector<8xf32>
    %87 = vector.shape_cast %86 : vector<8xf32> to vector<8x1xf32>
    %88 = vector.broadcast %87 : vector<8x1xf32> to vector<8x8xf32>
    %89 = arith.subf %85, %88 : vector<8x8xf32>
    %90 = math.exp %89 : vector<8x8xf32>
    %cst_47 = arith.constant dense<0.000000e+00> : vector<8xf32>
    %91 = vector.multi_reduction <add>, %90, %cst_47 [1] : vector<8x8xf32> to vector<8xf32>
    %92 = vector.shape_cast %91 : vector<8xf32> to vector<8x1xf32>
    %93 = vector.broadcast %92 : vector<8x1xf32> to vector<8x8xf32>
    %94 = arith.divf %90, %93 : vector<8x8xf32>
    %cst_48 = arith.constant dense<0.000000e+00> : vector<8x8xf32>
    %95 = tpu.matmul %94, %82, %cst_48 {dimension_numbers = #tpu.dot_dimension_numbers<[1], [0], [0], [1], [0, 0, 1, 1], [], []>} : vector<8x8xf32>, vector<8x8xf32>, vector<8x8xf32> -> vector<8x8xf32>
    %c24 = arith.constant 24 : index
    %c0_49 = arith.constant 0 : index
    %96 = vector.load %arg10[%c24, %c0_49] : memref<32x32xf32, #tpu.memory_space<vmem>>, vector<8x32xf32>
    %cst_50 = arith.constant dense<0.000000e+00> : vector<8x32xf32>
    %97 = tpu.matmul %95, %96, %cst_50 {dimension_numbers = #tpu.dot_dimension_numbers<[1], [0], [0], [1], [0, 0, 1, 1], [], []>} : vector<8x8xf32>, vector<8x32xf32>, vector<8x32xf32> -> vector<8x32xf32>
    %98 = arith.addf %79, %97 : vector<8x32xf32>
    %cst_51 = arith.constant dense<0.000000e+00> : vector<8xf32>
    %99 = vector.multi_reduction <add>, %98, %cst_51 [1] : vector<8x32xf32> to vector<8xf32>
    %100 = vector.shape_cast %99 : vector<8xf32> to vector<8x1xf32>
    %cst_52 = arith.constant 3.200000e+01 : f32
    %101 = vector.broadcast %cst_52 : f32 to vector<8x1xf32>
    %102 = arith.divf %100, %101 : vector<8x1xf32>
    %103 = vector.broadcast %102 : vector<8x1xf32> to vector<8x32xf32>
    %104 = arith.subf %98, %103 : vector<8x32xf32>
    %105 = arith.mulf %104, %104 : vector<8x32xf32>
    %cst_53 = arith.constant dense<0.000000e+00> : vector<8xf32>
    %106 = vector.multi_reduction <add>, %105, %cst_53 [1] : vector<8x32xf32> to vector<8xf32>
    %107 = vector.shape_cast %106 : vector<8xf32> to vector<8x1xf32>
    %cst_54 = arith.constant 3.200000e+01 : f32
    %108 = vector.broadcast %cst_54 : f32 to vector<8x1xf32>
    %109 = arith.divf %107, %108 : vector<8x1xf32>
    %110 = vector.broadcast %102 : vector<8x1xf32> to vector<8x32xf32>
    %111 = arith.subf %98, %110 : vector<8x32xf32>
    %cst_55 = arith.constant 9.99999974E-6 : f32
    %112 = vector.broadcast %cst_55 : f32 to vector<8x1xf32>
    %113 = arith.addf %109, %112 : vector<8x1xf32>
    %114 = math.rsqrt %113 : vector<8x1xf32>
    %115 = vector.broadcast %114 : vector<8x1xf32> to vector<8x32xf32>
    %116 = arith.mulf %111, %115 : vector<8x32xf32>
    %c0_56 = arith.constant 0 : index
    %c0_57 = arith.constant 0 : index
    %117 = vector.load %arg12[%c0_56, %c0_57] : memref<1x32xf32, #tpu.memory_space<vmem>>, vector<1x32xf32>
    %118 = vector.broadcast %117 : vector<1x32xf32> to vector<8x32xf32>
    %119 = arith.mulf %116, %118 : vector<8x32xf32>
    %c0_58 = arith.constant 0 : index
    %c0_59 = arith.constant 0 : index
    %120 = vector.load %arg13[%c0_58, %c0_59] : memref<1x32xf32, #tpu.memory_space<vmem>>, vector<1x32xf32>
    %121 = vector.broadcast %120 : vector<1x32xf32> to vector<8x32xf32>
    %122 = arith.addf %119, %121 : vector<8x32xf32>
    %c0_60 = arith.constant 0 : index
    %c0_61 = arith.constant 0 : index
    %c0_62 = arith.constant 0 : index
    %123 = vector.load %arg14[%c0_60, %c0_61, %c0_62] : memref<1x8x32xf32, #tpu.memory_space<vmem>>, vector<1x8x32xf32>
    %124 = vector.shape_cast %123 : vector<1x8x32xf32> to vector<8x32xf32>
    %125 = vector.shape_cast %122 : vector<8x32xf32> to vector<1x8x32xf32>
    tpu.vector_store %arg14[%c0_60, %c0_61, %c0_62], %125 {strides = array<i32>} : memref<1x8x32xf32, #tpu.memory_space<vmem>>, vector<1x8x32xf32>,
    return
  }
  func.func @transform_0(%arg0: i32, %arg1: i32) -> (i32, i32, i32) {
    %c0_i32 = arith.constant 0 : i32
    %c0_i32_0 = arith.constant 0 : i32
    return %arg0, %arg1, %c0_i32 : i32, i32, i32
  }
  func.func @transform_1(%arg0: i32, %arg1: i32) -> (i32, i32, i32) {
    %c0_i32 = arith.constant 0 : i32
    %c0_i32_0 = arith.constant 0 : i32
    return %arg0, %arg1, %c0_i32 : i32, i32, i32
  }
  func.func @transform_2(%arg0: i32, %arg1: i32) -> (i32, i32, i32) {
    %c0_i32 = arith.constant 0 : i32
    %c0_i32_0 = arith.constant 0 : i32
    %c0_i32_1 = arith.constant 0 : i32
    return %arg0, %c0_i32, %c0_i32_0 : i32, i32, i32
  }
  func.func @transform_3(%arg0: i32, %arg1: i32) -> (i32, i32, i32) {
    %c0_i32 = arith.constant 0 : i32
    %c0_i32_0 = arith.constant 0 : i32
    %c0_i32_1 = arith.constant 0 : i32
    return %arg0, %c0_i32, %c0_i32_0 : i32, i32, i32
  }
  func.func @transform_4(%arg0: i32, %arg1: i32) -> (i32, i32) {
    %c0_i32 = arith.constant 0 : i32
    %c0_i32_0 = arith.constant 0 : i32
    %c0_i32_1 = arith.constant 0 : i32
    return %c0_i32, %c0_i32_0 : i32, i32
  }
  func.func @transform_5(%arg0: i32, %arg1: i32) -> (i32, i32) {
    %c0_i32 = arith.constant 0 : i32
    %c0_i32_0 = arith.constant 0 : i32
    %c0_i32_1 = arith.constant 0 : i32
    return %c0_i32, %c0_i32_0 : i32, i32
  }
  func.func @transform_6(%arg0: i32, %arg1: i32) -> (i32, i32) {
    %c0_i32 = arith.constant 0 : i32
    %c0_i32_0 = arith.constant 0 : i32
    %c0_i32_1 = arith.constant 0 : i32
    return %c0_i32, %c0_i32_0 : i32, i32
  }
  func.func @transform_7(%arg0: i32, %arg1: i32) -> (i32, i32) {
    %c0_i32 = arith.constant 0 : i32
    %c0_i32_0 = arith.constant 0 : i32
    %c0_i32_1 = arith.constant 0 : i32
    return %c0_i32, %c0_i32_0 : i32, i32
  }
  func.func @transform_8(%arg0: i32, %arg1: i32) -> (i32, i32) {
    %c0_i32 = arith.constant 0 : i32
    %c0_i32_0 = arith.constant 0 : i32
    %c0_i32_1 = arith.constant 0 : i32
    return %c0_i32, %c0_i32_0 : i32, i32
  }
  func.func @transform_9(%arg0: i32, %arg1: i32) -> (i32, i32) {
    %c0_i32 = arith.constant 0 : i32
    %c0_i32_0 = arith.constant 0 : i32
    %c0_i32_1 = arith.constant 0 : i32
    return %c0_i32, %c0_i32_0 : i32, i32
  }
  func.func @transform_10(%arg0: i32, %arg1: i32) -> (i32, i32) {
    %c0_i32 = arith.constant 0 : i32
    %c0_i32_0 = arith.constant 0 : i32
    %c0_i32_1 = arith.constant 0 : i32
    return %c0_i32, %c0_i32_0 : i32, i32
  }
  func.func @transform_11(%arg0: i32, %arg1: i32) -> (i32, i32) {
    %c0_i32 = arith.constant 0 : i32
    %c0_i32_0 = arith.constant 0 : i32
    %c0_i32_1 = arith.constant 0 : i32
    return %c0_i32, %c0_i32_0 : i32, i32
  }
  func.func @transform_12(%arg0: i32, %arg1: i32) -> (i32, i32, i32) {
    %c0_i32 = arith.constant 0 : i32
    %c0_i32_0 = arith.constant 0 : i32
    return %arg0, %arg1, %c0_i32 : i32, i32, i32
  }
}

</mosaic_0001>

<llo_original>
// kernel: tpu_custom_call.1
$region0: #{tpu_custom_call.1}
  #allocation0 [shape = 'u32[]', space=smem, size = 0x4, offset = 0x4, fixed_abs, tag = 'smem constant byte address 0x4 - core index']
  #allocation1 [shape = 'u32[72,128]{1,0:T(1,128)}', space=vmem, size = 0x9000, scoped, tag = 'internal scratch']
  %s0 = inlined_call_operand.hbm [shape: f32[2,8,32], index: 0, kind: input, shape index: {}]
  %s1 = inlined_call_operand.hbm [shape: f32[2,8,32], index: 1, kind: input, shape index: {}]
  %s2 = inlined_call_operand.hbm [shape: f32[2,8,32], index: 2, kind: input, shape index: {}]
  %s3 = inlined_call_operand.hbm [shape: f32[2,8,32], index: 3, kind: input, shape index: {}]
  %s4 = inlined_call_operand.hbm [shape: f32[32,32], index: 4, kind: input, shape index: {}]
  %s5 = inlined_call_operand.vmem [shape: f32[1,32], index: 5, kind: input, shape index: {}]
  %s6 = inlined_call_operand.hbm [shape: f32[32,64], index: 6, kind: input, shape index: {}]
  %s7 = inlined_call_operand.vmem [shape: f32[1,64], index: 7, kind: input, shape index: {}]
  %s8 = inlined_call_operand.hbm [shape: f32[32,32], index: 8, kind: input, shape index: {}]
  %s9 = inlined_call_operand.vmem [shape: f32[1,32], index: 9, kind: input, shape index: {}]
  %s10 = inlined_call_operand.vmem [shape: f32[1,32], index: 10, kind: input, shape index: {}]
  %s11 = inlined_call_operand.vmem [shape: f32[1,32], index: 11, kind: input, shape index: {}]
  %s12 = inlined_call_operand.hbm [shape: f32[2,8,32], index: 12, kind: output, shape index: {}]
  %s13 = sld [smem:[#allocation0]]
  $region109: #{tpu_custom_call.1} parent=0
    _
  %s15 = ssub.s32 1, %s13
  %s16 = scalar_select 0, %s15, %s13
  $region1: #{tpu_custom_call.1} parent=0
    #allocation2 [shape = 'u8[8192]{0}', space=vmem, size = 0x2000, scoped, tag = 'input window, operand 0']
    #allocation3 [shape = 's32[2]{0}', space=sflag, size = 0x8, scoped, tag = 'scoped memory for tpu_custom_call.1']
    #allocation4 [shape = 's32[2]{0}', space=sflag, size = 0x8, scoped, tag = 'scoped memory for tpu_custom_call.1']
    #allocation5 [shape = 'u8[8192]{0}', space=vmem, size = 0x2000, scoped, tag = 'input window, operand 1']
    #allocation6 [shape = 's32[2]{0}', space=sflag, size = 0x8, scoped, tag = 'scoped memory for tpu_custom_call.1']
    #allocation7 [shape = 'u8[8192]{0}', space=vmem, size = 0x2000, scoped, tag = 'input window, operand 2']
    #allocation8 [shape = 'u8[8192]{0}', space=vmem, size = 0x2000, scoped, tag = 'input window, operand 3']
    #allocation9 [shape = 's32[2]{0}', space=sflag, size = 0x8, scoped, tag = 'scoped memory for tpu_custom_call.1']
    #allocation10 [shape = 'u8[16384]{0}', space=vmem, size = 0x4000, scoped, tag = 'input window, operand 4, single buffered']
    #allocation11 [shape = 'u8[16384]{0}', space=vmem, size = 0x4000, scoped, tag = 'input window, operand 6, single buffered']
    #allocation12 [shape = 's32[1]{0}', space=sflag, size = 0x4, scoped, tag = 'scoped memory for tpu_custom_call.1']
    #allocation13 [shape = 'u8[16384]{0}', space=vmem, size = 0x4000, scoped, tag = 'input window, operand 8, single buffered']
    #allocation14 [shape = 'u8[8192]{0}', space=vmem, size = 0x2000, scoped, tag = 'output window, operand 0']
    %17 = vsyncpa [#allocation3], 0
    %s18 = scalar_lea.sflag [#allocation3], 1
    %19 = vsyncpa %s18, 0
    %20 = vsyncpa [#allocation6], 0
    %s21 = scalar_lea.sflag [#allocation6], 1
    %22 = vsyncpa %s21, 0
    %23 = vsyncpa [#allocation9], 0
    %s24 = scalar_lea.sflag [#allocation9], 1
    %25 = vsyncpa %s24, 0
    %26 = vsyncpa [#allocation12], 0
    %27 = vsyncpa [#allocation4], 0
    %s28 = scalar_lea.sflag [#allocation4], 1
    %29 = vsyncpa %s28, 0
    loop: start=0, step=1, limit=4
    $region2: #{tpu_custom_call.1} parent=1 // loop_pre_header
      _
    $region3: #{tpu_custom_call.1} parent=1 // loop_header
      %s31 = sphi 0, %s35
      %p32 = scmp.ge.s32.totalorder %s31, 4
      %s38 = sphi 0, %s50
      %s39 = sphi 0, %s46
      %s40 = sphi 0, %s38
      %s41 = sphi 0, %s39
      %s42 = sphi 0, %s40
      %s43 = sphi 0, %s41
      %s55 = sphi 0, %s57
      %s58 = sphi 0, %s55
      %s59 = sphi 0, %s58
      %s75 = sphi 0, %s59
      %s83 = sphi 0, %s85
      %s86 = sphi 0, %s83
      %s87 = sphi 0, %s86
      %s103 = sphi 0, %s87
      %s109 = sphi 0, %s111
      %s112 = sphi 0, %s109
      %s113 = sphi 0, %s112
      %s129 = sphi 0, %s113
      %s135 = sphi 0, %s137
      %s138 = sphi 0, %s135
      %s139 = sphi 0, %s138
      %s155 = sphi 0, %s139
      %s159 = sphi 0, %s159
      %s161 = sphi 0, %s159
      %s162 = sphi 0, %s161
      %s176 = sphi 0, %s162
      %s180 = sphi 0, %s180
      %s182 = sphi 0, %s180
      %s183 = sphi 0, %s182
      %s197 = sphi 0, %s183
      %s201 = sphi 0, %s201
      %s203 = sphi 0, %s201
      %s204 = sphi 0, %s203
      %s218 = sphi 0, %s204
      %s222 = sphi 0, %s222
      %s224 = sphi 0, %s222
      %s225 = sphi 0, %s224
      %s239 = sphi 0, %s225
      %s243 = sphi 0, %s243
      %s245 = sphi 0, %s243
      %s246 = sphi 0, %s245
      %s260 = sphi 0, %s246
      %s264 = sphi 0, %s264
      %s266 = sphi 0, %s264
      %s267 = sphi 0, %s266
      %s281 = sphi 0, %s267
      %s285 = sphi 0, %s285
      %s287 = sphi 0, %s285
      %s288 = sphi 0, %s287
      %s302 = sphi 0, %s288
      %s306 = sphi 0, %s306
      %s308 = sphi 0, %s306
      %s309 = sphi 0, %s308
      %s323 = sphi 0, %s309
      %s331 = sphi 0, %s333
      %s334 = sphi 0, %s331
      %s335 = sphi 0, %s334
      %s351 = sphi 0, %s335
    $region4: #{tpu_custom_call.1} parent=1 // loop_header_branch
      %34 = sbr.rel (%p32) target = $region8
    $region5: #{tpu_custom_call.1} parent=1 // loop_body
      %s36 = ssub.s32 %s31, 1
      %s37 = ssub.s32 %s31, 2
      %s44 = sadd.s32 1, %s39
      %p45 = scmp.ge.s32.totalorder %s44, 1
      %s46 = scalar_select %p45, 0, %s44
      %s47 = sadd.s32 1, %s38
      %s48 = scalar_select %p45, %s47, %s38
      %p49 = scmp.ge.s32.totalorder %s48, 2
      %s50 = scalar_select %p49, 0, %s48
      %s51 = ssub.s32 %s38, %s50
      %s52 = ssub.s32 %s39, %s46
      %s53 = sor.u32 %s51, %s52
      %p54 = scmp.eq.s32.totalorder %s53, 0
      %s56 = sadd.s32 %s55, 1
      %s57 = scalar_select %p54, %s55, %s56
      %p60 = pneg %p54
      %p61 = scmp.eq.s32.totalorder %s31, 1
      %p62 = por %p60, %p61
      %p63 = scmp.ne.s32.totalorder %s55, %s58
      %p64 = scmp.eq.s32.totalorder %s31, 0
      %p65 = por %p63, %p64
      %p66 = scmp.ne.s32.totalorder %s55, %s58
      %p67 = scmp.eq.s32.totalorder %s36, 1
      %p68 = por %p66, %p67
      %p69 = scmp.ne.s32.totalorder %s58, %s59
      %p70 = scmp.eq.s32.totalorder %s36, 0
      %p71 = por %p69, %p70
      %p72 = scmp.ne.s32.totalorder %s58, %s59
      %p73 = scmp.eq.s32.totalorder %s37, 1
      %p74 = por %p72, %p73
      %p76 = scmp.ne.s32.totalorder %s59, %s75
      %p77 = scmp.eq.s32.totalorder %s37, 0
      %p78 = por %p76, %p77
      %s79 = ssub.s32 %s38, %s50
      %s80 = ssub.s32 %s39, %s46
      %s81 = sor.u32 %s79, %s80
      %p82 = scmp.eq.s32.totalorder %s81, 0
      %s84 = sadd.s32 %s83, 1
      %s85 = scalar_select %p82, %s83, %s84
      %p88 = pneg %p82
      %p89 = scmp.eq.s32.totalorder %s31, 1
      %p90 = por %p88, %p89
      %p91 = scmp.ne.s32.totalorder %s83, %s86
      %p92 = scmp.eq.s32.totalorder %s31, 0
      %p93 = por %p91, %p92
      %p94 = scmp.ne.s32.totalorder %s83, %s86
      %p95 = scmp.eq.s32.totalorder %s36, 1
      %p96 = por %p94, %p95
      %p97 = scmp.ne.s32.totalorder %s86, %s87
      %p98 = scmp.eq.s32.totalorder %s36, 0
      %p99 = por %p97, %p98
      %p100 = scmp.ne.s32.totalorder %s86, %s87
      %p101 = scmp.eq.s32.totalorder %s37, 1
      %p102 = por %p100, %p101
      %p104 = scmp.ne.s32.totalorder %s87, %s103
      %p105 = scmp.eq.s32.totalorder %s37, 0
      %p106 = por %p104, %p105
      %s107 = ssub.s32 %s38, %s50
      %p108 = scmp.eq.s32.totalorder %s107, 0
      %s110 = sadd.s32 %s109, 1
      %s111 = scalar_select %p108, %s109, %s110
      %p114 = pneg %p108
      %p115 = scmp.eq.s32.totalorder %s31, 1
      %p116 = por %p114, %p115
      %p117 = scmp.ne.s32.totalorder %s109, %s112
      %p118 = scmp.eq.s32.totalorder %s31, 0
      %p119 = por %p117, %p118
      %p120 = scmp.ne.s32.totalorder %s109, %s112
      %p121 = scmp.eq.s32.totalorder %s36, 1
      %p122 = por %p120, %p121
      %p123 = scmp.ne.s32.totalorder %s112, %s113
      %p124 = scmp.eq.s32.totalorder %s36, 0
      %p125 = por %p123, %p124
      %p126 = scmp.ne.s32.totalorder %s112, %s113
      %p127 = scmp.eq.s32.totalorder %s37, 1
      %p128 = por %p126, %p127
      %p130 = scmp.ne.s32.totalorder %s113, %s129
      %p131 = scmp.eq.s32.totalorder %s37, 0
      %p132 = por %p130, %p131
      %s133 = ssub.s32 %s38, %s50
      %p134 = scmp.eq.s32.totalorder %s133, 0
      %s136 = sadd.s32 %s135, 1
      %s137 = scalar_select %p134, %s135, %s136
      %p140 = pneg %p134
      %p141 = scmp.eq.s32.totalorder %s31, 1
      %p142 = por %p140, %p141
      %p143 = scmp.ne.s32.totalorder %s135, %s138
      %p144 = scmp.eq.s32.totalorder %s31, 0
      %p145 = por %p143, %p144
      %p146 = scmp.ne.s32.totalorder %s135, %s138
      %p147 = scmp.eq.s32.totalorder %s36, 1
      %p148 = por %p146, %p147
      %p149 = scmp.ne.s32.totalorder %s138, %s139
      %p150 = scmp.eq.s32.totalorder %s36, 0
      %p151 = por %p149, %p150
      %p152 = scmp.ne.s32.totalorder %s138, %s139
      %p153 = scmp.eq.s32.totalorder %s37, 1
      %p154 = por %p152, %p153
      %p156 = scmp.ne.s32.totalorder %s139, %s155
      %p157 = scmp.eq.s32.totalorder %s37, 0
      %p158 = por %p156, %p157
      %s160 = sadd.s32 %s159, 1
      %p163 = scmp.eq.s32.totalorder %s31, 1
      %p164 = scmp.ne.s32.totalorder %s159, %s161
      %p165 = scmp.eq.s32.totalorder %s31, 0
      %p166 = por %p164, %p165
      %p167 = scmp.ne.s32.totalorder %s159, %s161
      %p168 = scmp.eq.s32.totalorder %s36, 1
      %p169 = por %p167, %p168
      %p170 = scmp.ne.s32.totalorder %s161, %s162
      %p171 = scmp.eq.s32.totalorder %s36, 0
      %p172 = por %p170, %p171
      %p173 = scmp.ne.s32.totalorder %s161, %s162
      %p174 = scmp.eq.s32.totalorder %s37, 1
      %p175 = por %p173, %p174
      %p177 = scmp.ne.s32.totalorder %s162, %s176
      %p178 = scmp.eq.s32.totalorder %s37, 0
      %p179 = por %p177, %p178
      %s181 = sadd.s32 %s180, 1
      %p184 = scmp.eq.s32.totalorder %s31, 1
      %p185 = scmp.ne.s32.totalorder %s180, %s182
      %p186 = scmp.eq.s32.totalorder %s31, 0
      %p187 = por %p185, %p186
      %p188 = scmp.ne.s32.totalorder %s180, %s182
      %p189 = scmp.eq.s32.totalorder %s36, 1
      %p190 = por %p188, %p189
      %p191 = scmp.ne.s32.totalorder %s182, %s183
      %p192 = scmp.eq.s32.totalorder %s36, 0
      %p193 = por %p191, %p192
      %p194 = scmp.ne.s32.totalorder %s182, %s183
      %p195 = scmp.eq.s32.totalorder %s37, 1
      %p196 = por %p194, %p195
      %p198 = scmp.ne.s32.totalorder %s183, %s197
      %p199 = scmp.eq.s32.totalorder %s37, 0
      %p200 = por %p198, %p199
      %s202 = sadd.s32 %s201, 1
      %p205 = scmp.eq.s32.totalorder %s31, 1
      %p206 = scmp.ne.s32.totalorder %s201, %s203
      %p207 = scmp.eq.s32.totalorder %s31, 0
      %p208 = por %p206, %p207
      %p209 = scmp.ne.s32.totalorder %s201, %s203
      %p210 = scmp.eq.s32.totalorder %s36, 1
      %p211 = por %p209, %p210
      %p212 = scmp.ne.s32.totalorder %s203, %s204
      %p213 = scmp.eq.s32.totalorder %s36, 0
      %p214 = por %p212, %p213
      %p215 = scmp.ne.s32.totalorder %s203, %s204
      %p216 = scmp.eq.s32.totalorder %s37, 1
      %p217 = por %p215, %p216
      %p219 = scmp.ne.s32.totalorder %s204, %s218
      %p220 = scmp.eq.s32.totalorder %s37, 0
      %p221 = por %p219, %p220
      %s223 = sadd.s32 %s222, 1
      %p226 = scmp.eq.s32.totalorder %s31, 1
      %p227 = scmp.ne.s32.totalorder %s222, %s224
      %p228 = scmp.eq.s32.totalorder %s31, 0
      %p229 = por %p227, %p228
      %p230 = scmp.ne.s32.totalorder %s222, %s224
      %p231 = scmp.eq.s32.totalorder %s36, 1
      %p232 = por %p230, %p231
      %p233 = scmp.ne.s32.totalorder %s224, %s225
      %p234 = scmp.eq.s32.totalorder %s36, 0
      %p235 = por %p233, %p234
      %p236 = scmp.ne.s32.totalorder %s224, %s225
      %p237 = scmp.eq.s32.totalorder %s37, 1
      %p238 = por %p236, %p237
      %p240 = scmp.ne.s32.totalorder %s225, %s239
      %p241 = scmp.eq.s32.totalorder %s37, 0
      %p242 = por %p240, %p241
      %s244 = sadd.s32 %s243, 1
      %p247 = scmp.eq.s32.totalorder %s31, 1
      %p248 = scmp.ne.s32.totalorder %s243, %s245
      %p249 = scmp.eq.s32.totalorder %s31, 0
      %p250 = por %p248, %p249
      %p251 = scmp.ne.s32.totalorder %s243, %s245
      %p252 = scmp.eq.s32.totalorder %s36, 1
      %p253 = por %p251, %p252
      %p254 = scmp.ne.s32.totalorder %s245, %s246
      %p255 = scmp.eq.s32.totalorder %s36, 0
      %p256 = por %p254, %p255
      %p257 = scmp.ne.s32.totalorder %s245, %s246
      %p258 = scmp.eq.s32.totalorder %s37, 1
      %p259 = por %p257, %p258
      %p261 = scmp.ne.s32.totalorder %s246, %s260
      %p262 = scmp.eq.s32.totalorder %s37, 0
      %p263 = por %p261, %p262
      %s265 = sadd.s32 %s264, 1
      %p268 = scmp.eq.s32.totalorder %s31, 1
      %p269 = scmp.ne.s32.totalorder %s264, %s266
      %p270 = scmp.eq.s32.totalorder %s31, 0
      %p271 = por %p269, %p270
      %p272 = scmp.ne.s32.totalorder %s264, %s266
      %p273 = scmp.eq.s32.totalorder %s36, 1
      %p274 = por %p272, %p273
      %p275 = scmp.ne.s32.totalorder %s266, %s267
      %p276 = scmp.eq.s32.totalorder %s36, 0
      %p277 = por %p275, %p276
      %p278 = scmp.ne.s32.totalorder %s266, %s267
      %p279 = scmp.eq.s32.totalorder %s37, 1
      %p280 = por %p278, %p279
      %p282 = scmp.ne.s32.totalorder %s267, %s281
      %p283 = scmp.eq.s32.totalorder %s37, 0
      %p284 = por %p282, %p283
      %s286 = sadd.s32 %s285, 1
      %p289 = scmp.eq.s32.totalorder %s31, 1
      %p290 = scmp.ne.s32.totalorder %s285, %s287
      %p291 = scmp.eq.s32.totalorder %s31, 0
      %p292 = por %p290, %p291
      %p293 = scmp.ne.s32.totalorder %s285, %s287
      %p294 = scmp.eq.s32.totalorder %s36, 1
      %p295 = por %p293, %p294
      %p296 = scmp.ne.s32.totalorder %s287, %s288
      %p297 = scmp.eq.s32.totalorder %s36, 0
      %p298 = por %p296, %p297
      %p299 = scmp.ne.s32.totalorder %s287, %s288
      %p300 = scmp.eq.s32.totalorder %s37, 1
      %p301 = por %p299, %p300
      %p303 = scmp.ne.s32.totalorder %s288, %s302
      %p304 = scmp.eq.s32.totalorder %s37, 0
      %p305 = por %p303, %p304
      %s307 = sadd.s32 %s306, 1
      %p310 = scmp.eq.s32.totalorder %s31, 1
      %p311 = scmp.ne.s32.totalorder %s306, %s308
      %p312 = scmp.eq.s32.totalorder %s31, 0
      %p313 = por %p311, %p312
      %p314 = scmp.ne.s32.totalorder %s306, %s308
      %p315 = scmp.eq.s32.totalorder %s36, 1
      %p316 = por %p314, %p315
      %p317 = scmp.ne.s32.totalorder %s308, %s309
      %p318 = scmp.eq.s32.totalorder %s36, 0
      %p319 = por %p317, %p318
      %p320 = scmp.ne.s32.totalorder %s308, %s309
      %p321 = scmp.eq.s32.totalorder %s37, 1
      %p322 = por %p320, %p321
      %p324 = scmp.ne.s32.totalorder %s309, %s323
      %p325 = scmp.eq.s32.totalorder %s37, 0
      %p326 = por %p324, %p325
      %s327 = ssub.s32 %s38, %s50
      %s328 = ssub.s32 %s39, %s46
      %s329 = sor.u32 %s327, %s328
      %p330 = scmp.eq.s32.totalorder %s329, 0
      %s332 = sadd.s32 %s331, 1
      %s333 = scalar_select %p330, %s331, %s332
      %p336 = pneg %p330
      %p337 = scmp.eq.s32.totalorder %s31, 1
      %p338 = por %p336, %p337
      %p339 = scmp.ne.s32.totalorder %s331, %s334
      %p340 = scmp.eq.s32.totalorder %s31, 0
      %p341 = por %p339, %p340
      %p342 = scmp.ne.s32.totalorder %s331, %s334
      %p343 = scmp.eq.s32.totalorder %s36, 1
      %p344 = por %p342, %p343
      %p345 = scmp.ne.s32.totalorder %s334, %s335
      %p346 = scmp.eq.s32.totalorder %s36, 0
      %p347 = por %p345, %p346
      %p348 = scmp.ne.s32.totalorder %s334, %s335
      %p349 = scmp.eq.s32.totalorder %s37, 1
      %p350 = por %p348, %p349
      %p352 = scmp.ne.s32.totalorder %s335, %s351
      %p353 = scmp.eq.s32.totalorder %s37, 0
      %p354 = por %p352, %p353
      %p355 = scmp.le.s32.totalorder 1, %s31
      %p356 = scmp.lt.s32.totalorder %s31, 3
      %p357 = pnand %p355, %p356
      %p358 = pneg %p357
      // Predicated region
      $region9: #{tpu_custom_call.1} parent=5 // pred_check
        _
      $region10: #{tpu_custom_call.1} parent=5 // pred_check_branch
        %360 = sbr.rel (%p357) target = $region12
      $region11: #{tpu_custom_call.1} parent=5 // pred_region
        %s361 = ssub.s32 %s31, 1
        // Predicated region
        $region13: #{tpu_custom_call.1} parent=11 // pred_check
          %p362 = pneg %p172
        $region14: #{tpu_custom_call.1} parent=11 // pred_check_branch
          %364 = sbr.rel (%p362) target = $region16
        $region15: #{tpu_custom_call.1} parent=11 // pred_region
          %366 = vsyncadd [#allocation9], 0
          %s367 = sshll.u32 %s4, 4
          %s368 = int_to_ptr.hbm [resolvable:$true] %s367
          %s369 = sshll.u32 [#allocation10], 4
          %s370 = int_to_ptr.vmem [resolvable:$true] %s369
          %375 = dma.hbm_to_vmem [thread:$0]  %s368, 512, %s370, [#allocation9], 128, 128, 8
        $region16: #{tpu_custom_call.1} parent=11 // pred_fallthru
          _
        // Predicated region
        $region17: #{tpu_custom_call.1} parent=11 // pred_check
          %p376 = pneg %p193
        $region18: #{tpu_custom_call.1} parent=11 // pred_check_branch
          %378 = sbr.rel (%p376) target = $region20
        $region19: #{tpu_custom_call.1} parent=11 // pred_region
          _
        $region20: #{tpu_custom_call.1} parent=11 // pred_fallthru
          _
        // Predicated region
        $region21: #{tpu_custom_call.1} parent=11 // pred_check
          %p379 = pneg %p214
        $region22: #{tpu_custom_call.1} parent=11 // pred_check_branch
          %381 = sbr.rel (%p379) target = $region24
        $region23: #{tpu_custom_call.1} parent=11 // pred_region
          %383 = vsyncadd [#allocation12], 0
          %s384 = sshll.u32 %s6, 4
          %s385 = int_to_ptr.hbm [resolvable:$true] %s384
          %s386 = sshll.u32 [#allocation11], 4
          %s387 = int_to_ptr.vmem [resolvable:$true] %s386
          %392 = dma.hbm_to_vmem [thread:$0]  %s385, 512, %s387, [#allocation12], 128, 128, 8
        $region24: #{tpu_custom_call.1} parent=11 // pred_fallthru
          _
        // Predicated region
        $region25: #{tpu_custom_call.1} parent=11 // pred_check
          %p393 = pneg %p235
        $region26: #{tpu_custom_call.1} parent=11 // pred_check_branch
          %395 = sbr.rel (%p393) target = $region28
        $region27: #{tpu_custom_call.1} parent=11 // pred_region
          _
        $region28: #{tpu_custom_call.1} parent=11 // pred_fallthru
          _
        // Predicated region
        $region29: #{tpu_custom_call.1} parent=11 // pred_check
          %p396 = pneg %p256
        $region30: #{tpu_custom_call.1} parent=11 // pred_check_branch
          %398 = sbr.rel (%p396) target = $region32
        $region31: #{tpu_custom_call.1} parent=11 // pred_region
          %400 = vsyncadd [#allocation12], 0
          %s401 = sshll.u32 %s8, 4
          %s402 = int_to_ptr.hbm [resolvable:$true] %s401
          %s403 = sshll.u32 [#allocation13], 4
          %s404 = int_to_ptr.vmem [resolvable:$true] %s403
          %409 = dma.hbm_to_vmem [thread:$0]  %s402, 512, %s404, [#allocation12], 128, 128, 8
        $region32: #{tpu_custom_call.1} parent=11 // pred_fallthru
          _
        // Predicated region
        $region33: #{tpu_custom_call.1} parent=11 // pred_check
          %p410 = pneg %p277
        $region34: #{tpu_custom_call.1} parent=11 // pred_check_branch
          %412 = sbr.rel (%p410) target = $region36
        $region35: #{tpu_custom_call.1} parent=11 // pred_region
          _
        $region36: #{tpu_custom_call.1} parent=11 // pred_fallthru
          _
        // Predicated region
        $region37: #{tpu_custom_call.1} parent=11 // pred_check
          %p413 = pneg %p298
        $region38: #{tpu_custom_call.1} parent=11 // pred_check_branch
          %415 = sbr.rel (%p413) target = $region40
        $region39: #{tpu_custom_call.1} parent=11 // pred_region
          _
        $region40: #{tpu_custom_call.1} parent=11 // pred_fallthru
          _
        // Predicated region
        $region41: #{tpu_custom_call.1} parent=11 // pred_check
          %p416 = pneg %p319
        $region42: #{tpu_custom_call.1} parent=11 // pred_check_branch
          %418 = sbr.rel (%p416) target = $region44
        $region43: #{tpu_custom_call.1} parent=11 // pred_region
          _
        $region44: #{tpu_custom_call.1} parent=11 // pred_fallthru
          _
      $region12: #{tpu_custom_call.1} parent=5 // pred_fallthru
        _
      %p419 = scmp.lt.s32.totalorder %s31, 2
      // Predicated region
      $region45: #{tpu_custom_call.1} parent=5 // pred_check
        %p420 = pneg %p419
      $region46: #{tpu_custom_call.1} parent=5 // pred_check_branch
        %422 = sbr.rel (%p420) target = $region48
      $region47: #{tpu_custom_call.1} parent=5 // pred_region
        // Predicated region
        $region49: #{tpu_custom_call.1} parent=47 // pred_check
          %p423 = pneg %p65
        $region50: #{tpu_custom_call.1} parent=47 // pred_check_branch
          %425 = sbr.rel (%p423) target = $region52
        $region51: #{tpu_custom_call.1} parent=47 // pred_region
          %s426 = sand.u32 %s55, 1
          %s427 = scalar_lea.sflag [#allocation3], %s426
          %s428 = sand.u32 %s55, 1
          %s429 = smul.addr %s428, 8
          %s430 = scalar_lea.vmem [#allocation2], %s429
          %432 = vsyncadd %s427, 0
          %s433 = sadd.s32 %s39, %s38
          %s434 = smul.addr %s433, 8
          %s435 = scalar_lea.hbm %s0, %s434
          %s437 = sshll.u32 %s435, 4
          %s438 = int_to_ptr.hbm [resolvable:$true] %s437
          %s439 = sshll.u32 %s430, 4
          %s440 = int_to_ptr.vmem [resolvable:$true] %s439
          %442 = dma.hbm_to_vmem [thread:$0]  %s438, 128, %s440, %s427
        $region52: #{tpu_custom_call.1} parent=47 // pred_fallthru
          _
        // Predicated region
        $region53: #{tpu_custom_call.1} parent=47 // pred_check
          %p443 = pneg %p93
        $region54: #{tpu_custom_call.1} parent=47 // pred_check_branch
          %445 = sbr.rel (%p443) target = $region56
        $region55: #{tpu_custom_call.1} parent=47 // pred_region
          %s446 = sand.u32 %s31, 1
          %s447 = scalar_lea.sflag [#allocation6], %s446
          %s448 = sand.u32 %s83, 1
          %s449 = smul.addr %s448, 8
          %s450 = scalar_lea.vmem [#allocation5], %s449
          %452 = vsyncadd %s447, 0
          %s453 = sadd.s32 %s39, %s38
          %s454 = smul.addr %s453, 8
          %s455 = scalar_lea.hbm %s1, %s454
          %s457 = sshll.u32 %s455, 4
          %s458 = int_to_ptr.hbm [resolvable:$true] %s457
          %s459 = sshll.u32 %s450, 4
          %s460 = int_to_ptr.vmem [resolvable:$true] %s459
          %462 = dma.hbm_to_vmem [thread:$0]  %s458, 128, %s460, %s447
        $region56: #{tpu_custom_call.1} parent=47 // pred_fallthru
          _
        // Predicated region
        $region57: #{tpu_custom_call.1} parent=47 // pred_check
          %p463 = pneg %p119
        $region58: #{tpu_custom_call.1} parent=47 // pred_check_branch
          %465 = sbr.rel (%p463) target = $region60
        $region59: #{tpu_custom_call.1} parent=47 // pred_region
          %s466 = sand.u32 %s31, 1
          %s467 = scalar_lea.sflag [#allocation6], %s466
          %s468 = sand.u32 %s109, 1
          %s469 = smul.addr %s468, 8
          %s470 = scalar_lea.vmem [#allocation7], %s469
          %472 = vsyncadd %s467, 0
          %s473 = smul.addr %s38, 8
          %s474 = scalar_lea.hbm %s2, %s473
          %s476 = sshll.u32 %s474, 4
          %s477 = int_to_ptr.hbm [resolvable:$true] %s476
          %s478 = sshll.u32 %s470, 4
          %s479 = int_to_ptr.vmem [resolvable:$true] %s478
          %481 = dma.hbm_to_vmem [thread:$0]  %s477, 128, %s479, %s467
        $region60: #{tpu_custom_call.1} parent=47 // pred_fallthru
          _
        // Predicated region
        $region61: #{tpu_custom_call.1} parent=47 // pred_check
          %p482 = pneg %p145
        $region62: #{tpu_custom_call.1} parent=47 // pred_check_branch
          %484 = sbr.rel (%p482) target = $region64
        $region63: #{tpu_custom_call.1} parent=47 // pred_region
          %s485 = sand.u32 %s31, 1
          %s486 = scalar_lea.sflag [#allocation9], %s485
          %s487 = sand.u32 %s135, 1
          %s488 = smul.addr %s487, 8
          %s489 = scalar_lea.vmem [#allocation8], %s488
          %491 = vsyncadd %s486, 0
          %s492 = smul.addr %s38, 8
          %s493 = scalar_lea.hbm %s3, %s492
          %s495 = sshll.u32 %s493, 4
          %s496 = int_to_ptr.hbm [resolvable:$true] %s495
          %s497 = sshll.u32 %s489, 4
          %s498 = int_to_ptr.vmem [resolvable:$true] %s497
          %500 = dma.hbm_to_vmem [thread:$0]  %s496, 128, %s498, %s486
        $region64: #{tpu_custom_call.1} parent=47 // pred_fallthru
          _
      $region48: #{tpu_custom_call.1} parent=5 // pred_fallthru
        _
      %p501 = scmp.le.s32.totalorder 1, %s31
      %p502 = scmp.lt.s32.totalorder %s31, 3
      %p503 = pnand %p501, %p502
      %p504 = pneg %p503
      // Predicated region
      $region65: #{tpu_custom_call.1} parent=5 // pred_check
        _
      $region66: #{tpu_custom_call.1} parent=5 // pred_check_branch
        %506 = sbr.rel (%p503) target = $region68
      $region67: #{tpu_custom_call.1} parent=5 // pred_region
        %s507 = ssub.s32 %s31, 1
        %s508 = sand.u32 %s58, 1
        %s509 = scalar_lea.sflag [#allocation3], %s508
        %s510 = sand.u32 %s58, 1
        %s511 = smul.addr %s510, 8
        %s512 = scalar_lea.vmem [#allocation2], %s511
        // Predicated region
        $region69: #{tpu_custom_call.1} parent=67 // pred_check
          %p513 = pneg %p71
        $region70: #{tpu_custom_call.1} parent=67 // pred_check_branch
          %515 = sbr.rel (%p513) target = $region72
        $region71: #{tpu_custom_call.1} parent=67 // pred_region
          %517 = dma.done %s509, 128
        $region72: #{tpu_custom_call.1} parent=67 // pred_fallthru
          _
        %s518 = sand.u32 %s36, 1
        %s519 = scalar_lea.sflag [#allocation6], %s518
        %s520 = sand.u32 %s86, 1
        %s521 = smul.addr %s520, 8
        %s522 = scalar_lea.vmem [#allocation5], %s521
        // Predicated region
        $region73: #{tpu_custom_call.1} parent=67 // pred_check
          %p523 = pneg %p99
        $region74: #{tpu_custom_call.1} parent=67 // pred_check_branch
          %525 = sbr.rel (%p523) target = $region76
        $region75: #{tpu_custom_call.1} parent=67 // pred_region
          %527 = dma.done %s519, 128
        $region76: #{tpu_custom_call.1} parent=67 // pred_fallthru
          _
        %s528 = sand.u32 %s36, 1
        %s529 = scalar_lea.sflag [#allocation6], %s528
        %s530 = sand.u32 %s112, 1
        %s531 = smul.addr %s530, 8
        %s532 = scalar_lea.vmem [#allocation7], %s531
        // Predicated region
        $region77: #{tpu_custom_call.1} parent=67 // pred_check
          %p533 = pneg %p125
        $region78: #{tpu_custom_call.1} parent=67 // pred_check_branch
          %535 = sbr.rel (%p533) target = $region80
        $region79: #{tpu_custom_call.1} parent=67 // pred_region
          %537 = dma.done %s529, 128
        $region80: #{tpu_custom_call.1} parent=67 // pred_fallthru
          _
        %s538 = sand.u32 %s36, 1
        %s539 = scalar_lea.sflag [#allocation9], %s538
        %s540 = sand.u32 %s138, 1
        %s541 = smul.addr %s540, 8
        %s542 = scalar_lea.vmem [#allocation8], %s541
        // Predicated region
        $region81: #{tpu_custom_call.1} parent=67 // pred_check
          %p543 = pneg %p151
        $region82: #{tpu_custom_call.1} parent=67 // pred_check_branch
          %545 = sbr.rel (%p543) target = $region84
        $region83: #{tpu_custom_call.1} parent=67 // pred_region
          %547 = dma.done %s539, 128
        $region84: #{tpu_custom_call.1} parent=67 // pred_fallthru
          _
        // Predicated region
        $region85: #{tpu_custom_call.1} parent=67 // pred_check
          %p548 = pneg %p172
        $region86: #{tpu_custom_call.1} parent=67 // pred_check_branch
          %550 = sbr.rel (%p548) target = $region88
        $region87: #{tpu_custom_call.1} parent=67 // pred_region
          %552 = dma.done [#allocation9], 512
        $region88: #{tpu_custom_call.1} parent=67 // pred_fallthru
          _
        // Predicated region
        $region89: #{tpu_custom_call.1} parent=67 // pred_check
          %p553 = pneg %p214
        $region90: #{tpu_custom_call.1} parent=67 // pred_check_branch
          %555 = sbr.rel (%p553) target = $region92
        $region91: #{tpu_custom_call.1} parent=67 // pred_region
          %557 = dma.done [#allocation12], 512
        $region92: #{tpu_custom_call.1} parent=67 // pred_fallthru
          _
        // Predicated region
        $region93: #{tpu_custom_call.1} parent=67 // pred_check
          %p558 = pneg %p256
        $region94: #{tpu_custom_call.1} parent=67 // pred_check_branch
          %560 = sbr.rel (%p558) target = $region96
        $region95: #{tpu_custom_call.1} parent=67 // pred_region
          %562 = dma.done [#allocation12], 512
        $region96: #{tpu_custom_call.1} parent=67 // pred_fallthru
          _
        %s563 = sand.u32 %s58, 1
        %s564 = scalar_lea.sflag [#allocation3], %s563
        %s565 = sand.u32 %s58, 1
        %s566 = smul.addr %s565, 8
        %s567 = scalar_lea.vmem [#allocation2], %s566
        %p568 = pneg %p71
        %p569 = pneg %p68
        %s570 = sand.u32 %s36, 1
        %s571 = scalar_lea.sflag [#allocation6], %s570
        %s572 = sand.u32 %s86, 1
        %s573 = smul.addr %s572, 8
        %s574 = scalar_lea.vmem [#allocation5], %s573
        %p575 = pneg %p99
        %p576 = pneg %p96
        %s577 = sand.u32 %s36, 1
        %s578 = scalar_lea.sflag [#allocation6], %s577
        %s579 = sand.u32 %s112, 1
        %s580 = smul.addr %s579, 8
        %s581 = scalar_lea.vmem [#allocation7], %s580
        %p582 = pneg %p125
        %p583 = pneg %p122
        %s584 = sand.u32 %s36, 1
        %s585 = scalar_lea.sflag [#allocation9], %s584
        %s586 = sand.u32 %s138, 1
        %s587 = smul.addr %s586, 8
        %s588 = scalar_lea.vmem [#allocation8], %s587
        %p589 = pneg %p151
        %p590 = pneg %p148
        %p591 = pneg %p172
        %p592 = pneg %p169
        %p593 = pneg %p193
        %p594 = pneg %p190
        %p595 = pneg %p214
        %p596 = pneg %p211
        %p597 = pneg %p235
        %p598 = pneg %p232
        %p599 = pneg %p256
        %p600 = pneg %p253
        %p601 = pneg %p277
        %p602 = pneg %p274
        %p603 = pneg %p298
        %p604 = pneg %p295
        %p605 = pneg %p319
        %p606 = pneg %p316
        %p607 = pneg %p347
        %p608 = pneg %p344
        %s609 = sand.u32 %s334, 1
        %s610 = scalar_lea.sflag [#allocation4], %s609
        %s611 = sand.u32 %s334, 1
        %s612 = smul.addr %s611, 8
        %s613 = scalar_lea.vmem [#allocation14], %s612
        %v614 = vld [vmem:[%s512] sm:$0xff]
        %v615 = vld [vmem:[%s522] sm:$0xff]
        %v616 = vadd.f32 %v614, %v615
        %v617 = vld [vmem:[%s532] sm:$0xff]
        %v618 = vld [vmem:[%s542] sm:$0xff]
        %v619 = vadd.f32 %v617, %v618
        %v620 = vld [vmem:[#allocation10] sm:$0xff]
        %v621 = vld [vmem:[#allocation10 + $0x8] sm:$0xff]
        %v622 = vld [vmem:[#allocation10 + $0x10] sm:$0xff]
        %v623 = vld [vmem:[#allocation10 + $0x18] sm:$0xff]
        %v624 = vld [vmem:[%s5] sm:$0x1]
        %v626 = vperm.slane %v624, 0
        %vm628 = vcmask 261120
        %v630 = vsel %vm628, %v616, 0
        %632 = vmatpush.msra.mxu0 0.0
        %633 = vmatpush.msra.mxu0 0.0
        %634 = vmatpush.msra.mxu0 0.0
        %635 = vmatpush.msra.mxu0 0.0
        %636 = vmatpush.msra.mxu0 0.0
        %637 = vmatpush.msra.mxu0 0.0
        %638 = vmatpush.msra.mxu0 0.0
        %639 = vmatpush.msra.mxu0 0.0
        %640 = vmatpush.msra.mxu0 0.0
        %641 = vmatpush.msra.mxu0 0.0
        %642 = vmatpush.msra.mxu0 0.0
        %643 = vmatpush.msra.mxu0 0.0
        %644 = vmatpush.msra.mxu0 %v623
        %645 = vmatpush.msra.mxu0 %v622
        %646 = vmatpush.msra.mxu0 %v621
        %647 = vmatpush.msra.mxu0 %v620
        %648 = vmatmul.f32.gmra.mxu0 %v630
        %v649 = vpop.f32.mrf.mxu0
        %v650 = vadd.f32 %v626, %v649
        %651 = vdwg.mxu0
        %v652 = vld [vmem:[#allocation11] sm:$0xff]
        %v653 = vld [vmem:[#allocation11 + $0x8] sm:$0xff]
        %v654 = vld [vmem:[#allocation11 + $0x10] sm:$0xff]
        %v655 = vld [vmem:[#allocation11 + $0x18] sm:$0xff]
        %v656 = vld [vmem:[%s7] sm:$0x1]
        %v658 = vperm.slane %v656, 0
        %v661 = vsel %vm628, %v619, 0
        %663 = vmatpush.msra.mxu0 0.0
        %664 = vmatpush.msra.mxu0 0.0
        %665 = vmatpush.msra.mxu0 0.0
        %666 = vmatpush.msra.mxu0 0.0
        %667 = vmatpush.msra.mxu0 0.0
        %668 = vmatpush.msra.mxu0 0.0
        %669 = vmatpush.msra.mxu0 0.0
        %670 = vmatpush.msra.mxu0 0.0
        %671 = vmatpush.msra.mxu0 0.0
        %672 = vmatpush.msra.mxu0 0.0
        %673 = vmatpush.msra.mxu0 0.0
        %674 = vmatpush.msra.mxu0 0.0
        %675 = vmatpush.msra.mxu0 %v655
        %676 = vmatpush.msra.mxu0 %v654
        %677 = vmatpush.msra.mxu0 %v653
        %678 = vmatpush.msra.mxu0 %v652
        %679 = vmatmul.f32.gmra.mxu0 %v661
        %v680 = vpop.f32.mrf.mxu0
        %v681 = vadd.f32 %v658, %v680
        %682 = vdwg.mxu0
        %v683 = vld [vmem:[%s9] sm:$0x1]
        %v685 = vperm.slane %v683, 0
        %v687 = vadd.f32 %v616, %v685
        %vm688 = vcmask 64512
        %v690 = vsel %vm688, %v650, 0
        %v693 = vsel %vm688, %v681, 0
        %695 = vmatpush.xpose.msra.mxu0 0.0
        %696 = vmatpush.xpose.msra.mxu0 0.0
        %697 = vmatpush.xpose.msra.mxu0 0.0
        %698 = vmatpush.xpose.msra.mxu0 0.0
        %699 = vmatpush.xpose.msra.mxu0 0.0
        %700 = vmatpush.xpose.msra.mxu0 0.0
        %701 = vmatpush.xpose.msra.mxu0 0.0
        %702 = vmatpush.xpose.msra.mxu0 0.0
        %703 = vmatpush.xpose.msra.mxu0 0.0
        %704 = vmatpush.xpose.msra.mxu0 0.0
        %705 = vmatpush.xpose.msra.mxu0 0.0
        %706 = vmatpush.xpose.msra.mxu0 0.0
        %707 = vmatpush.xpose.msra.mxu0 0.0
        %708 = vmatpush.xpose.msra.mxu0 0.0
        %709 = vmatpush.xpose.msra.mxu0 0.0
        %710 = vmatpush.xpose.msra.mxu0 %v693
        %711 = vmatmul.f32.gmra.mxu0 %v690
        %v712 = vpop.f32.mrf.mxu0
        %v713 = vadd.f32 0.0, %v712
        %714 = vdwg.mxu0
        %v715 = vmul.f32 %v713, 0.35355338
        %v716 = vsel %vm688, %v715, -inf
        %717 = vmax.xlane.f32.xlu0 %v716
        %v718 = vpop.xlane.xlu0 %717
        %v719 = vsub.f32 %v715, %v718
        %v720 = vmul.f32 %v719, 1.442695
        %v721 = vpow.pop %v720
        %v722 = vsel %vm688, %v721, 0.0
        %723 = vadd.xlane.f32.xlu0 %v722
        %v724 = vpop.xlane.xlu0 %723
        %v725 = vrcp.pop %v724
        %v726 = vmul.f32 %v724, %v725
        %v727 = vsub.f32 1.0, %v726
        %v728 = vmul.f32 %v725, %v727
        %v729 = vadd.f32 %v725, %v728
        %vm730 = vweird.f32 %v724
        %vm731 = vweird.f32 %v725
        %vm732 = vmor %vm730, %vm731
        %v733 = vsel %vm732, %v725, %v729
        %v734 = vand.u32 2147483647, %v724
        %vm735 = vcmp.eq.f32.partialorder %v734, 8.507059e+37
        %v736 = vand.u32 %v724, 2147483648
        %v737 = vor.u32 1.1754944e-38, %v736
        %v738 = vsel %vm735, %v737, %v733
        %v739 = vmul.f32 %v721, %v738
        %740 = vrot.lane.b32.xlu0 %v681, 96
        %v741 = vpop.permute.xlu0 %740
        %v744 = vsel %vm688, %v739, 0
        %746 = vmatpush.msra.mxu0 0.0
        %747 = vmatpush.msra.mxu0 0.0
        %748 = vmatpush.msra.mxu0 0.0
        %749 = vmatpush.msra.mxu0 0.0
        %750 = vmatpush.msra.mxu0 0.0
        %751 = vmatpush.msra.mxu0 0.0
        %752 = vmatpush.msra.mxu0 0.0
        %753 = vmatpush.msra.mxu0 0.0
        %754 = vmatpush.msra.mxu0 0.0
        %755 = vmatpush.msra.mxu0 0.0
        %756 = vmatpush.msra.mxu0 0.0
        %757 = vmatpush.msra.mxu0 0.0
        %758 = vmatpush.msra.mxu0 0.0
        %759 = vmatpush.msra.mxu0 0.0
        %760 = vmatpush.msra.mxu0 0.0
        %761 = vmatpush.msra.mxu0 %v741
        %762 = vmatmul.f32.gmra.mxu0 %v744
        %v763 = vpop.f32.mrf.mxu0
        %v764 = vadd.f32 0.0, %v763
        %765 = vdwg.mxu0
        %v766 = vld [vmem:[#allocation13] sm:$0xff]
        %v768 = vsel %vm688, %v764, 0
        %770 = vmatpush.msra.mxu0 0.0
        %771 = vmatpush.msra.mxu0 0.0
        %772 = vmatpush.msra.mxu0 0.0
        %773 = vmatpush.msra.mxu0 0.0
        %774 = vmatpush.msra.mxu0 0.0
        %775 = vmatpush.msra.mxu0 0.0
        %776 = vmatpush.msra.mxu0 0.0
        %777 = vmatpush.msra.mxu0 0.0
        %778 = vmatpush.msra.mxu0 0.0
        %779 = vmatpush.msra.mxu0 0.0
        %780 = vmatpush.msra.mxu0 0.0
        %781 = vmatpush.msra.mxu0 0.0
        %782 = vmatpush.msra.mxu0 0.0
        %783 = vmatpush.msra.mxu0 0.0
        %784 = vmatpush.msra.mxu0 0.0
        %785 = vmatpush.msra.mxu0 %v766
        %786 = vmatmul.f32.gmra.mxu0 %v768
        %v787 = vpop.f32.mrf.mxu0
        %v788 = vadd.f32 0.0, %v787
        %789 = vdwg.mxu0
        %v790 = vadd.f32 %v687, %v788
        %791 = vrot.lane.b32.xlu0 %v650, 120
        %v792 = vpop.permute.xlu0 %791
        %793 = vrot.lane.b32.xlu0 %v681, 120
        %v794 = vpop.permute.xlu0 %793
        %v795 = vsel %vm688, %v792, 0
        %v797 = vsel %vm688, %v794, 0
        %799 = vmatpush.xpose.msra.mxu0 0.0
        %800 = vmatpush.xpose.msra.mxu0 0.0
        %801 = vmatpush.xpose.msra.mxu0 0.0
        %802 = vmatpush.xpose.msra.mxu0 0.0
        %803 = vmatpush.xpose.msra.mxu0 0.0
        %804 = vmatpush.xpose.msra.mxu0 0.0
        %805 = vmatpush.xpose.msra.mxu0 0.0
        %806 = vmatpush.xpose.msra.mxu0 0.0
        %807 = vmatpush.xpose.msra.mxu0 0.0
        %808 = vmatpush.xpose.msra.mxu0 0.0
        %809 = vmatpush.xpose.msra.mxu0 0.0
        %810 = vmatpush.xpose.msra.mxu0 0.0
        %811 = vmatpush.xpose.msra.mxu0 0.0
        %812 = vmatpush.xpose.msra.mxu0 0.0
        %813 = vmatpush.xpose.msra.mxu0 0.0
        %814 = vmatpush.xpose.msra.mxu0 %v797
        %815 = vmatmul.f32.gmra.mxu0 %v795
        %v816 = vpop.f32.mrf.mxu0
        %v817 = vadd.f32 0.0, %v816
        %818 = vdwg.mxu0
        %v819 = vmul.f32 %v817, 0.35355338
        %v820 = vsel %vm688, %v819, -inf
        %821 = vmax.xlane.f32.xlu0 %v820
        %v822 = vpop.xlane.xlu0 %821
        %v823 = vsub.f32 %v819, %v822
        %v824 = vmul.f32 %v823, 1.442695
        %v825 = vpow.pop %v824
        %v826 = vsel %vm688, %v825, 0.0
        %827 = vadd.xlane.f32.xlu0 %v826
        %v828 = vpop.xlane.xlu0 %827
        %v829 = vrcp.pop %v828
        %v830 = vmul.f32 %v828, %v829
        %v831 = vsub.f32 1.0, %v830
        %v832 = vmul.f32 %v829, %v831
        %v833 = vadd.f32 %v829, %v832
        %vm834 = vweird.f32 %v828
        %vm835 = vweird.f32 %v829
        %vm836 = vmor %vm834, %vm835
        %v837 = vsel %vm836, %v829, %v833
        %v838 = vand.u32 2147483647, %v828
        %vm839 = vcmp.eq.f32.partialorder %v838, 8.507059e+37
        %v840 = vand.u32 %v828, 2147483648
        %v841 = vor.u32 1.1754944e-38, %v840
        %v842 = vsel %vm839, %v841, %v837
        %v843 = vmul.f32 %v825, %v842
        %844 = vrot.lane.b32.xlu0 %v681, 88
        %v845 = vpop.permute.xlu0 %844
        %v848 = vsel %vm688, %v843, 0
        %850 = vmatpush.msra.mxu0 0.0
        %851 = vmatpush.msra.mxu0 0.0
        %852 = vmatpush.msra.mxu0 0.0
        %853 = vmatpush.msra.mxu0 0.0
        %854 = vmatpush.msra.mxu0 0.0
        %855 = vmatpush.msra.mxu0 0.0
        %856 = vmatpush.msra.mxu0 0.0
        %857 = vmatpush.msra.mxu0 0.0
        %858 = vmatpush.msra.mxu0 0.0
        %859 = vmatpush.msra.mxu0 0.0
        %860 = vmatpush.msra.mxu0 0.0
        %861 = vmatpush.msra.mxu0 0.0
        %862 = vmatpush.msra.mxu0 0.0
        %863 = vmatpush.msra.mxu0 0.0
        %864 = vmatpush.msra.mxu0 0.0
        %865 = vmatpush.msra.mxu0 %v845
        %866 = vmatmul.f32.gmra.mxu0 %v848
        %v867 = vpop.f32.mrf.mxu0
        %v868 = vadd.f32 0.0, %v867
        %869 = vdwg.mxu0
        %v870 = vld [vmem:[#allocation13 + $0x8] sm:$0xff]
        %v872 = vsel %vm688, %v868, 0
        %874 = vmatpush.msra.mxu0 0.0
        %875 = vmatpush.msra.mxu0 0.0
        %876 = vmatpush.msra.mxu0 0.0
        %877 = vmatpush.msra.mxu0 0.0
        %878 = vmatpush.msra.mxu0 0.0
        %879 = vmatpush.msra.mxu0 0.0
        %880 = vmatpush.msra.mxu0 0.0
        %881 = vmatpush.msra.mxu0 0.0
        %882 = vmatpush.msra.mxu0 0.0
        %883 = vmatpush.msra.mxu0 0.0
        %884 = vmatpush.msra.mxu0 0.0
        %885 = vmatpush.msra.mxu0 0.0
        %886 = vmatpush.msra.mxu0 0.0
        %887 = vmatpush.msra.mxu0 0.0
        %888 = vmatpush.msra.mxu0 0.0
        %889 = vmatpush.msra.mxu0 %v870
        %890 = vmatmul.f32.gmra.mxu0 %v872
        %v891 = vpop.f32.mrf.mxu0
        %v892 = vadd.f32 0.0, %v891
        %893 = vdwg.mxu0
        %v894 = vadd.f32 %v790, %v892
        %895 = vrot.lane.b32.xlu0 %v650, 112
        %v896 = vpop.permute.xlu0 %895
        %897 = vrot.lane.b32.xlu0 %v681, 112
        %v898 = vpop.permute.xlu0 %897
        %v899 = vsel %vm688, %v896, 0
        %v901 = vsel %vm688, %v898, 0
        %903 = vmatpush.xpose.msra.mxu0 0.0
        %904 = vmatpush.xpose.msra.mxu0 0.0
        %905 = vmatpush.xpose.msra.mxu0 0.0
        %906 = vmatpush.xpose.msra.mxu0 0.0
        %907 = vmatpush.xpose.msra.mxu0 0.0
        %908 = vmatpush.xpose.msra.mxu0 0.0
        %909 = vmatpush.xpose.msra.mxu0 0.0
        %910 = vmatpush.xpose.msra.mxu0 0.0
        %911 = vmatpush.xpose.msra.mxu0 0.0
        %912 = vmatpush.xpose.msra.mxu0 0.0
        %913 = vmatpush.xpose.msra.mxu0 0.0
        %914 = vmatpush.xpose.msra.mxu0 0.0
        %915 = vmatpush.xpose.msra.mxu0 0.0
        %916 = vmatpush.xpose.msra.mxu0 0.0
        %917 = vmatpush.xpose.msra.mxu0 0.0
        %918 = vmatpush.xpose.msra.mxu0 %v901
        %919 = vmatmul.f32.gmra.mxu0 %v899
        %v920 = vpop.f32.mrf.mxu0
        %v921 = vadd.f32 0.0, %v920
        %922 = vdwg.mxu0
        %v923 = vmul.f32 %v921, 0.35355338
        %v924 = vsel %vm688, %v923, -inf
        %925 = vmax.xlane.f32.xlu0 %v924
        %v926 = vpop.xlane.xlu0 %925
        %v927 = vsub.f32 %v923, %v926
        %v928 = vmul.f32 %v927, 1.442695
        %v929 = vpow.pop %v928
        %v930 = vsel %vm688, %v929, 0.0
        %931 = vadd.xlane.f32.xlu0 %v930
        %v932 = vpop.xlane.xlu0 %931
        %v933 = vrcp.pop %v932
        %v934 = vmul.f32 %v932, %v933
        %v935 = vsub.f32 1.0, %v934
        %v936 = vmul.f32 %v933, %v935
        %v937 = vadd.f32 %v933, %v936
        %vm938 = vweird.f32 %v932
        %vm939 = vweird.f32 %v933
        %vm940 = vmor %vm938, %vm939
        %v941 = vsel %vm940, %v933, %v937
        %v942 = vand.u32 2147483647, %v932
        %vm943 = vcmp.eq.f32.partialorder %v942, 8.507059e+37
        %v944 = vand.u32 %v932, 2147483648
        %v945 = vor.u32 1.1754944e-38, %v944
        %v946 = vsel %vm943, %v945, %v941
        %v947 = vmul.f32 %v929, %v946
        %948 = vrot.lane.b32.xlu0 %v681, 80
        %v949 = vpop.permute.xlu0 %948
        %v952 = vsel %vm688, %v947, 0
        %954 = vmatpush.msra.mxu0 0.0
        %955 = vmatpush.msra.mxu0 0.0
        %956 = vmatpush.msra.mxu0 0.0
        %957 = vmatpush.msra.mxu0 0.0
        %958 = vmatpush.msra.mxu0 0.0
        %959 = vmatpush.msra.mxu0 0.0
        %960 = vmatpush.msra.mxu0 0.0
        %961 = vmatpush.msra.mxu0 0.0
        %962 = vmatpush.msra.mxu0 0.0
        %963 = vmatpush.msra.mxu0 0.0
        %964 = vmatpush.msra.mxu0 0.0
        %965 = vmatpush.msra.mxu0 0.0
        %966 = vmatpush.msra.mxu0 0.0
        %967 = vmatpush.msra.mxu0 0.0
        %968 = vmatpush.msra.mxu0 0.0
        %969 = vmatpush.msra.mxu0 %v949
        %970 = vmatmul.f32.gmra.mxu0 %v952
        %v971 = vpop.f32.mrf.mxu0
        %v972 = vadd.f32 0.0, %v971
        %973 = vdwg.mxu0
        %v974 = vld [vmem:[#allocation13 + $0x10] sm:$0xff]
        %v976 = vsel %vm688, %v972, 0
        %978 = vmatpush.msra.mxu0 0.0
        %979 = vmatpush.msra.mxu0 0.0
        %980 = vmatpush.msra.mxu0 0.0
        %981 = vmatpush.msra.mxu0 0.0
        %982 = vmatpush.msra.mxu0 0.0
        %983 = vmatpush.msra.mxu0 0.0
        %984 = vmatpush.msra.mxu0 0.0
        %985 = vmatpush.msra.mxu0 0.0
        %986 = vmatpush.msra.mxu0 0.0
        %987 = vmatpush.msra.mxu0 0.0
        %988 = vmatpush.msra.mxu0 0.0
        %989 = vmatpush.msra.mxu0 0.0
        %990 = vmatpush.msra.mxu0 0.0
        %991 = vmatpush.msra.mxu0 0.0
        %992 = vmatpush.msra.mxu0 0.0
        %993 = vmatpush.msra.mxu0 %v974
        %994 = vmatmul.f32.gmra.mxu0 %v976
        %v995 = vpop.f32.mrf.mxu0
        %v996 = vadd.f32 0.0, %v995
        %997 = vdwg.mxu0
        %v998 = vadd.f32 %v894, %v996
        %999 = vrot.lane.b32.xlu0 %v650, 104
        %v1000 = vpop.permute.xlu0 %999
        %1001 = vrot.lane.b32.xlu0 %v681, 104
        %v1002 = vpop.permute.xlu0 %1001
        %v1003 = vsel %vm688, %v1000, 0
        %v1005 = vsel %vm688, %v1002, 0
        %1007 = vmatpush.xpose.msra.mxu0 0.0
        %1008 = vmatpush.xpose.msra.mxu0 0.0
        %1009 = vmatpush.xpose.msra.mxu0 0.0
        %1010 = vmatpush.xpose.msra.mxu0 0.0
        %1011 = vmatpush.xpose.msra.mxu0 0.0
        %1012 = vmatpush.xpose.msra.mxu0 0.0
        %1013 = vmatpush.xpose.msra.mxu0 0.0
        %1014 = vmatpush.xpose.msra.mxu0 0.0
        %1015 = vmatpush.xpose.msra.mxu0 0.0
        %1016 = vmatpush.xpose.msra.mxu0 0.0
        %1017 = vmatpush.xpose.msra.mxu0 0.0
        %1018 = vmatpush.xpose.msra.mxu0 0.0
        %1019 = vmatpush.xpose.msra.mxu0 0.0
        %1020 = vmatpush.xpose.msra.mxu0 0.0
        %1021 = vmatpush.xpose.msra.mxu0 0.0
        %1022 = vmatpush.xpose.msra.mxu0 %v1005
        %1023 = vmatmul.f32.gmra.mxu0 %v1003
        %v1024 = vpop.f32.mrf.mxu0
        %v1025 = vadd.f32 0.0, %v1024
        %1026 = vdwg.mxu0
        %v1027 = vmul.f32 %v1025, 0.35355338
        %v1028 = vsel %vm688, %v1027, -inf
        %1029 = vmax.xlane.f32.xlu0 %v1028
        %v1030 = vpop.xlane.xlu0 %1029
        %v1031 = vsub.f32 %v1027, %v1030
        %v1032 = vmul.f32 %v1031, 1.442695
        %v1033 = vpow.pop %v1032
        %v1034 = vsel %vm688, %v1033, 0.0
        %1035 = vadd.xlane.f32.xlu0 %v1034
        %v1036 = vpop.xlane.xlu0 %1035
        %v1037 = vrcp.pop %v1036
        %v1038 = vmul.f32 %v1036, %v1037
        %v1039 = vsub.f32 1.0, %v1038
        %v1040 = vmul.f32 %v1037, %v1039
        %v1041 = vadd.f32 %v1037, %v1040
        %vm1042 = vweird.f32 %v1036
        %vm1043 = vweird.f32 %v1037
        %vm1044 = vmor %vm1042, %vm1043
        %v1045 = vsel %vm1044, %v1037, %v1041
        %v1046 = vand.u32 2147483647, %v1036
        %vm1047 = vcmp.eq.f32.partialorder %v1046, 8.507059e+37
        %v1048 = vand.u32 %v1036, 2147483648
        %v1049 = vor.u32 1.1754944e-38, %v1048
        %v1050 = vsel %vm1047, %v1049, %v1045
        %v1051 = vmul.f32 %v1033, %v1050
        %1052 = vrot.lane.b32.xlu0 %v681, 72
        %v1053 = vpop.permute.xlu0 %1052
        %v1056 = vsel %vm688, %v1051, 0
        %1058 = vmatpush.msra.mxu0 0.0
        %1059 = vmatpush.msra.mxu0 0.0
        %1060 = vmatpush.msra.mxu0 0.0
        %1061 = vmatpush.msra.mxu0 0.0
        %1062 = vmatpush.msra.mxu0 0.0
        %1063 = vmatpush.msra.mxu0 0.0
        %1064 = vmatpush.msra.mxu0 0.0
        %1065 = vmatpush.msra.mxu0 0.0
        %1066 = vmatpush.msra.mxu0 0.0
        %1067 = vmatpush.msra.mxu0 0.0
        %1068 = vmatpush.msra.mxu0 0.0
        %1069 = vmatpush.msra.mxu0 0.0
        %1070 = vmatpush.msra.mxu0 0.0
        %1071 = vmatpush.msra.mxu0 0.0
        %1072 = vmatpush.msra.mxu0 0.0
        %1073 = vmatpush.msra.mxu0 %v1053
        %1074 = vmatmul.f32.gmra.mxu0 %v1056
        %v1075 = vpop.f32.mrf.mxu0
        %v1076 = vadd.f32 0.0, %v1075
        %1077 = vdwg.mxu0
        %v1078 = vld [vmem:[#allocation13 + $0x18] sm:$0xff]
        %v1080 = vsel %vm688, %v1076, 0
        %1082 = vmatpush.msra.mxu0 0.0
        %1083 = vmatpush.msra.mxu0 0.0
        %1084 = vmatpush.msra.mxu0 0.0
        %1085 = vmatpush.msra.mxu0 0.0
        %1086 = vmatpush.msra.mxu0 0.0
        %1087 = vmatpush.msra.mxu0 0.0
        %1088 = vmatpush.msra.mxu0 0.0
        %1089 = vmatpush.msra.mxu0 0.0
        %1090 = vmatpush.msra.mxu0 0.0
        %1091 = vmatpush.msra.mxu0 0.0
        %1092 = vmatpush.msra.mxu0 0.0
        %1093 = vmatpush.msra.mxu0 0.0
        %1094 = vmatpush.msra.mxu0 0.0
        %1095 = vmatpush.msra.mxu0 0.0
        %1096 = vmatpush.msra.mxu0 0.0
        %1097 = vmatpush.msra.mxu0 %v1078
        %1098 = vmatmul.f32.gmra.mxu0 %v1080
        %v1099 = vpop.f32.mrf.mxu0
        %v1100 = vadd.f32 0.0, %v1099
        %1101 = vdwg.mxu0
        %v1102 = vadd.f32 %v998, %v1100
        %v1103 = vsel %vm628, %v1102, 0.0
        %1104 = vadd.xlane.f32.xlu0 %v1103
        %v1105 = vpop.xlane.xlu0 %1104
        %v1106 = vrcp.pop 32.0
        %v1107 = vmul.f32 32.0, %v1106
        %v1108 = vsub.f32 1.0, %v1107
        %v1109 = vmul.f32 %v1106, %v1108
        %v1110 = vadd.f32 %v1106, %v1109
        %vm1111 = vweird.f32 %v1106
        %v1112 = vsel %vm1111, %v1106, %v1110
        %v1113 = vmul.f32 %v1105, %v1112
        %v1114 = vsub.f32 %v1102, %v1113
        %v1115 = vmul.f32 %v1114, %v1114
        %v1116 = vsel %vm628, %v1115, 0.0
        %1117 = vadd.xlane.f32.xlu0 %v1116
        %v1118 = vpop.xlane.xlu0 %1117
        %v1119 = vmul.f32 %v1118, %v1112
        %v1120 = vadd.f32 %v1119, 1e-05
        %v1121 = vrsqrt.pop %v1120
        %v1122 = vmul.f32 %v1121, %v1120
        %v1123 = vmul.f32 %v1122, %v1121
        %v1124 = vmul.f32 0.5, %v1123
        %v1125 = vsub.f32 1.5, %v1124
        %v1126 = vmul.f32 %v1121, %v1125
        %vm1127 = vweird.f32 %v1120
        %vm1128 = vweird.f32 %v1121
        %vm1129 = vmor %vm1127, %vm1128
        %v1130 = vsel %vm1129, %v1121, %v1126
        %v1131 = vmul.f32 %v1114, %v1130
        %v1132 = vld [vmem:[%s10] sm:$0x1]
        %v1134 = vperm.slane %v1132, 0
        %v1136 = vmul.f32 %v1131, %v1134
        %v1137 = vld [vmem:[%s11] sm:$0x1]
        %v1139 = vperm.slane %v1137, 0
        %v1141 = vadd.f32 %v1136, %v1139
        %1142 = vst.msk [vmem:[%s613] sm:$0xff] %vm628, %v1141
        %s1143 = sand.u32 %s334, 1
        %s1144 = scalar_lea.sflag [#allocation4], %s1143
        %s1145 = sand.u32 %s334, 1
        %s1146 = smul.addr %s1145, 8
        %s1147 = scalar_lea.vmem [#allocation14], %s1146
        // Predicated region
        $region97: #{tpu_custom_call.1} parent=67 // pred_check
          %p1148 = pneg %p344
        $region98: #{tpu_custom_call.1} parent=67 // pred_check_branch
          %1150 = sbr.rel (%p1148) target = $region100
        $region99: #{tpu_custom_call.1} parent=67 // pred_region
          %1152 = vsyncadd %s1144, 0
          %s1153 = sadd.s32 %s41, %s40
          %s1154 = smul.addr %s1153, 8
          %s1155 = scalar_lea.hbm %s12, %s1154
          %s1157 = sshll.u32 %s1147, 4
          %s1158 = int_to_ptr.vmem [resolvable:$true] %s1157
          %s1159 = sshll.u32 %s1155, 4
          %s1160 = int_to_ptr.hbm [resolvable:$true] %s1159
          %1162 = dma.vmem_to_hbm [thread:$0]  %s1158, 128, %s1160, %s1144
        $region100: #{tpu_custom_call.1} parent=67 // pred_fallthru
          _
      $region68: #{tpu_custom_call.1} parent=5 // pred_fallthru
        _
      %p1163 = scmp.le.s32.totalorder 2, %s31
      // Predicated region
      $region101: #{tpu_custom_call.1} parent=5 // pred_check
        %p1164 = pneg %p1163
      $region102: #{tpu_custom_call.1} parent=5 // pred_check_branch
        %1166 = sbr.rel (%p1164) target = $region104
      $region103: #{tpu_custom_call.1} parent=5 // pred_region
        %s1167 = ssub.s32 %s31, 2
        // Predicated region
        $region105: #{tpu_custom_call.1} parent=103 // pred_check
          %p1168 = pneg %p350
        $region106: #{tpu_custom_call.1} parent=103 // pred_check_branch
          %1170 = sbr.rel (%p1168) target = $region108
        $region107: #{tpu_custom_call.1} parent=103 // pred_region
          %s1171 = sand.u32 %s335, 1
          %s1172 = scalar_lea.sflag [#allocation4], %s1171
          %s1173 = sand.u32 %s335, 1
          %s1174 = smul.addr %s1173, 8
          %s1175 = scalar_lea.vmem [#allocation14], %s1174
          %1177 = dma.done %s1172, 128
        $region108: #{tpu_custom_call.1} parent=103 // pred_fallthru
          _
      $region104: #{tpu_custom_call.1} parent=5 // pred_fallthru
        _
    $region6: #{tpu_custom_call.1} parent=1 // loop_footer
      %s35 = sadd.s32 1, %s31
    $region7: #{tpu_custom_call.1} parent=1 // loop_footer_branch
      %30 = sbr.rel target = $region3
    $region8: #{tpu_custom_call.1} parent=1 // loop_exit
      _
    %1178 = vsyncpa [#allocation3], 1
    %s1179 = scalar_lea.sflag [#allocation3], 1
    %1180 = vsyncpa %s1179, 1
    %1181 = vsyncpa [#allocation6], 1
    %s1182 = scalar_lea.sflag [#allocation6], 1
    %1183 = vsyncpa %s1182, 1
    %1184 = vsyncpa [#allocation9], 1
    %s1185 = scalar_lea.sflag [#allocation9], 1
    %1186 = vsyncpa %s1185, 1
    %1187 = vsyncpa [#allocation12], 1
    %1188 = vsyncpa [#allocation4], 1
    %s1189 = scalar_lea.sflag [#allocation4], 1
    %1190 = vsyncpa %s1189, 1

</llo_original>
